<compile_context>
chip_gen: v5e
topology: v5e:2x2
jax: 0.10.0
libtpu: 0.0.40
codegen_flags: <defaults>
</compile_context>

<pallas_src>
import functools

import jax
import jax.numpy as jnp
from jax.experimental import pallas as pl
from jax.experimental.pallas import tpu as pltpu

X_PAD = 128              # lane-padded width of the x part of concat(x, h)
O_PAD = 128              # lane-padded width of the logits
_NEG_BIG = -1e30         # "minus infinity" folded into the padded bias lanes


def _rnn_seq_kernel(h0_ref, x_ref, w_ref, b_ref, hseq_ref, logp_ref, comb_ref,
                    *, hidden_size):
    """One RNN step per grid iteration; state carried in VMEM scratch."""
    t = pl.program_id(0)

    # Step 0: load the initial hidden state into the resident concat buffer.
    @pl.when(t == 0)
    def _():
        comb_ref[:, X_PAD:] = h0_ref[...]

    # Current input goes into lanes [0:128) of the concat buffer.
    comb_ref[:, :X_PAD] = x_ref[0]

    # Single fused (B, 256) @ (256, 256) matmul.  Columns [0:H) -> i2h,
    # [H:H+output_size) -> i2o; the remaining logit columns have zero weights
    # and a -1e30 bias (the log-softmax mask).
    acc = jnp.dot(comb_ref[...], w_ref[...],
                  preferred_element_type=jnp.float32,
                  precision=jax.lax.Precision.HIGHEST)
    acc = acc + b_ref[...]

    new_h = acc[:, :hidden_size]          # (B, H)   lane-aligned split
    logits = acc[:, hidden_size:]         # (B, 128) pad lanes already ~ -1e30

    # LogSoftmax over the valid lanes; exp() of the -1e30 lanes is exactly 0.
    m = jnp.max(logits, axis=-1, keepdims=True)
    shifted = logits - m
    lse = jnp.log(jnp.sum(jnp.exp(shifted), axis=-1, keepdims=True))

    # Carry hidden state to the next grid step and emit per-step outputs.
    comb_ref[:, X_PAD:] = new_h.astype(comb_ref.dtype)
    hseq_ref[0] = new_h.astype(hseq_ref.dtype)
    logp_ref[0] = (shifted - lse).astype(logp_ref.dtype)


def prepare_params(params, input_size, hidden_size, output_size):
    """Stack i2h|i2o into one (X_PAD + H, H + 128) slab; fold mask into bias."""
    assert input_size <= X_PAD
    assert hidden_size % 128 == 0
    wh, bh = params["wh"], params["bh"]           # (D, H), (1, H)
    wo, bo = params["wo"], params["bo"]           # (D, O), (1, O)
    K = X_PAD + hidden_size                       # 256
    N = hidden_size + O_PAD                       # 256

    w = jnp.zeros((K, N), jnp.float32)
    # Rows for the (padded) input part of the concat.
    w = w.at[:input_size, :hidden_size].set(wh[:input_size])
    w = w.at[:input_size, hidden_size:hidden_size + output_size].set(wo[:input_size])
    # Rows for the hidden part of the concat.
    w = w.at[X_PAD:, :hidden_size].set(wh[input_size:])
    w = w.at[X_PAD:, hidden_size:hidden_size + output_size].set(wo[input_size:])

    b = jnp.zeros((1, N), jnp.float32)
    b = b.at[:, :hidden_size].set(bh.reshape(1, hidden_size))
    b = b.at[:, hidden_size:hidden_size + output_size].set(bo.reshape(1, output_size))
    # Log-softmax mask folded into the padded logit lanes.
    b = b.at[:, hidden_size + output_size:].set(_NEG_BIG)

    return {"w": w, "b": b}


def douban_rnn_sequence(x_seq, h0, fused, output_size):
    """Run T RNN steps in one pallas_call. Returns (hiddens, log_probs) per step."""
    T, B, input_size = x_seq.shape
    hidden_size = h0.shape[1]
    K = X_PAD + hidden_size
    N = hidden_size + O_PAD
    assert fused["w"].shape == (K, N)
    assert fused["b"].shape == (1, N)

    # One-time, wrapper-side lane padding of the inputs (30 -> 128).
    x_pad = jnp.pad(x_seq.astype(jnp.float32),
                    ((0, 0), (0, 0), (0, X_PAD - input_size)))

    kernel = functools.partial(_rnn_seq_kernel, hidden_size=hidden_size)

    flops = T * (2 * B * K * N + 6 * B * N)
    bytes_accessed = 4 * (K * N + N + B * hidden_size
                          + T * B * (X_PAD + hidden_size + O_PAD))

    h_seq, logp_padded = pl.pallas_call(
        kernel,
        grid=(T,),
        out_shape=(
            jax.ShapeDtypeStruct((T, B, hidden_size), jnp.float32),
            jax.ShapeDtypeStruct((T, B, O_PAD), jnp.float32),
        ),
        in_specs=[
            pl.BlockSpec((B, hidden_size), lambda t: (0, 0)),      # h0 (resident)
            pl.BlockSpec((1, B, X_PAD), lambda t: (t, 0, 0)),      # x_t (pipelined)
            pl.BlockSpec((K, N), lambda t: (0, 0)),                # weights (resident)
            pl.BlockSpec((1, N), lambda t: (0, 0)),                # bias (resident)
        ],
        out_specs=(
            pl.BlockSpec((1, B, hidden_size), lambda t: (t, 0, 0)),
            pl.BlockSpec((1, B, O_PAD), lambda t: (t, 0, 0)),
        ),
        scratch_shapes=[pltpu.VMEM((B, K), jnp.float32)],          # concat(x, h)
        compiler_params=pltpu.CompilerParams(
            dimension_semantics=("arbitrary",)),
        cost_estimate=pl.CostEstimate(
            flops=flops,
            transcendentals=T * B * (O_PAD + 1),
            bytes_accessed=bytes_accessed,
        ),
    )(h0, x_pad, fused["w"], fused["b"])

    return h_seq, logp_padded[:, :, :output_size]


def douban_rnn_forward(inp, hidden, fused, output_size):
    """Single RNN step matching the PyTorch module's forward(input, hidden)."""
    h_seq, logp = douban_rnn_sequence(inp[None], hidden, fused, output_size)
    return h_seq[0], logp[0]


def init_params(key, input_size=30, hidden_size=128, output_size=3):
    """Deterministic init mimicking nn.Linear (uniform +-1/sqrt(fan_in))."""
    D = input_size + hidden_size
    k1, k2, k3, k4 = jax.random.split(key, 4)
    bound = 1.0 / jnp.sqrt(jnp.float32(D))
    return {
        "wh": jax.random.uniform(k1, (D, hidden_size), jnp.float32, -bound, bound),
        "bh": jax.random.uniform(k2, (1, hidden_size), jnp.float32, -bound, bound),
        "wo": jax.random.uniform(k3, (D, output_size), jnp.float32, -bound, bound),
        "bo": jax.random.uniform(k4, (1, output_size), jnp.float32, -bound, bound),
    }


if __name__ == "__main__":
    input_size, hidden_size, output_size = 30, 128, 3
    batch, seq_len = 8, 16

    key = jax.random.PRNGKey(0)
    kp, kx = jax.random.split(key)
    params = init_params(kp, input_size, hidden_size, output_size)
    fused = prepare_params(params, input_size, hidden_size, output_size)

    x_seq = jax.random.normal(kx, (seq_len, batch, input_size), jnp.float32)
    h0 = jnp.zeros((batch, hidden_size), jnp.float32)   # init_hidden() per row

    run = jax.jit(lambda xs, h: douban_rnn_sequence(xs, h, fused, output_size))
    h_seq, logp_seq = run(x_seq, h0)
    jax.block_until_ready((h_seq, logp_seq))

    # Pure-JAX reference with the *unfused* weights (same math as PyTorch).
    hi = jax.lax.Precision.HIGHEST
    h = h0
    ref_hs, ref_lps = [], []
    for t in range(seq_len):
        comb = jnp.concatenate([x_seq[t], h], axis=1)
        h = jnp.dot(comb, params["wh"], precision=hi) + params["bh"]
        o = jnp.dot(comb, params["wo"], precision=hi) + params["bo"]
        ref_hs.append(h)
        ref_lps.append(jax.nn.log_softmax(o, axis=1))
    ref_h = jnp.stack(ref_hs)
    ref_lp = jnp.stack(ref_lps)

    assert h_seq.shape == (seq_len, batch, hidden_size)
    assert logp_seq.shape == (seq_len, batch, output_size)
    assert bool(jnp.all(jnp.isfinite(h_seq)))
    assert bool(jnp.all(jnp.isfinite(logp_seq)))
    assert jnp.allclose(h_seq, ref_h, atol=5e-3, rtol=1e-3)
    assert jnp.allclose(logp_seq, ref_lp, atol=5e-3, rtol=1e-3)

    # Single-step call matching the PyTorch module's forward() exactly.
    h1, lp1 = douban_rnn_forward(x_seq[0], h0, fused, output_size)
    jax.block_until_ready((h1, lp1))
    assert h1.shape == (batch, hidden_size)
    assert lp1.shape == (batch, output_size)
    assert jnp.allclose(h1, ref_h[0], atol=5e-3, rtol=1e-3)
    assert jnp.allclose(lp1, ref_lp[0], atol=5e-3, rtol=1e-3)

    print("KERNEL_OK")
</pallas_src>

<mosaic_0001>
module attributes {stable_mosaic.version = 11 : i64} {
  func.func @_rnn_seq_kernel(%arg0: i32, %arg1: memref<8x128xf32, #tpu.memory_space<vmem>>, %arg2: memref<1x8x128xf32, #tpu.memory_space<vmem>>, %arg3: memref<256x256xf32, #tpu.memory_space<vmem>>, %arg4: memref<1x256xf32, #tpu.memory_space<vmem>>, %arg5: memref<1x8x128xf32, #tpu.memory_space<vmem>>, %arg6: memref<1x8x128xf32, #tpu.memory_space<vmem>>, %arg7: memref<8x256xf32, #tpu.memory_space<vmem>>) attributes {dimension_semantics = [#tpu.dimension_semantics<arbitrary>], iteration_bounds = array<i64: 16>, scalar_prefetch = 0 : i64, scratch_operands = 1 : i64, tpu.core_type = #tpu.core_type<tc>, window_params = [{pipeline_mode = #tpu.pipeline_mode<synchronous>, transform_indices = @transform_0, window_bounds = array<i64: 8, 128>}, {transform_indices = @transform_1, window_bounds = array<i64: 1, 8, 128>}, {pipeline_mode = #tpu.pipeline_mode<synchronous>, transform_indices = @transform_2, window_bounds = array<i64: 256, 256>}, {pipeline_mode = #tpu.pipeline_mode<synchronous>, transform_indices = @transform_3, window_bounds = array<i64: 1, 256>}, {transform_indices = @transform_4, window_bounds = array<i64: 1, 8, 128>}, {transform_indices = @transform_5, window_bounds = array<i64: 1, 8, 128>}]} {
    %c0_i32 = arith.constant 0 : i32
    %0 = arith.cmpi eq, %arg0, %c0_i32 : i32
    %1 = arith.extui %0 : i1 to i32
    %c0_i32_0 = arith.constant 0 : i32
    %2 = arith.cmpi ne, %1, %c0_i32_0 : i32
    scf.if %2 {
      %c0_20 = arith.constant 0 : index
      %c0_21 = arith.constant 0 : index
      %31 = vector.load %arg1[%c0_20, %c0_21] : memref<8x128xf32, #tpu.memory_space<vmem>>, vector<8x128xf32>
      %c0_22 = arith.constant 0 : index
      %c128_23 = arith.constant 128 : index
      %32 = vector.load %arg7[%c0_22, %c128_23] : memref<8x256xf32, #tpu.memory_space<vmem>>, vector<8x128xf32>
      tpu.vector_store %arg7[%c0_22, %c128_23], %31 {strides = array<i32>} : memref<8x256xf32, #tpu.memory_space<vmem>>, vector<8x128xf32>,
    } else {
    }
    %c0 = arith.constant 0 : index
    %c0_1 = arith.constant 0 : index
    %c0_2 = arith.constant 0 : index
    %3 = vector.load %arg2[%c0, %c0_1, %c0_2] : memref<1x8x128xf32, #tpu.memory_space<vmem>>, vector<1x8x128xf32>
    %4 = vector.shape_cast %3 : vector<1x8x128xf32> to vector<8x128xf32>
    %c0_3 = arith.constant 0 : index
    %c0_4 = arith.constant 0 : index
    %5 = vector.load %arg7[%c0_3, %c0_4] : memref<8x256xf32, #tpu.memory_space<vmem>>, vector<8x128xf32>
    tpu.vector_store %arg7[%c0_3, %c0_4], %4 {strides = array<i32>} : memref<8x256xf32, #tpu.memory_space<vmem>>, vector<8x128xf32>,
    %c0_5 = arith.constant 0 : index
    %c0_6 = arith.constant 0 : index
    %6 = vector.load %arg7[%c0_5, %c0_6] : memref<8x256xf32, #tpu.memory_space<vmem>>, vector<8x256xf32>
    %c0_7 = arith.constant 0 : index
    %c0_8 = arith.constant 0 : index
    %7 = vector.load %arg3[%c0_7, %c0_8] : memref<256x256xf32, #tpu.memory_space<vmem>>, vector<256x256xf32>
    %cst = arith.constant dense<0.000000e+00> : vector<8x256xf32>
    %8 = tpu.matmul %6, %7, %cst {dimension_numbers = #tpu.dot_dimension_numbers<[1], [0], [0], [1], [0, 0, 1, 1], [], []>, precision = #tpu.contract_precision<fp32>} : vector<8x256xf32>, vector<256x256xf32>, vector<8x256xf32> -> vector<8x256xf32>
    %c0_9 = arith.constant 0 : index
    %c0_10 = arith.constant 0 : index
    %9 = vector.load %arg4[%c0_9, %c0_10] : memref<1x256xf32, #tpu.memory_space<vmem>>, vector<1x256xf32>
    %10 = vector.broadcast %9 : vector<1x256xf32> to vector<8x256xf32>
    %11 = arith.addf %8, %10 : vector<8x256xf32>
    %12 = vector.extract_strided_slice %11 {offsets = [0, 0], sizes = [8, 128], strides = [1, 1]} : vector<8x256xf32> to vector<8x128xf32>
    %13 = vector.extract_strided_slice %11 {offsets = [0, 128], sizes = [8, 128], strides = [1, 1]} : vector<8x256xf32> to vector<8x128xf32>
    %cst_11 = arith.constant dense<0xFF800000> : vector<8xf32>
    %14 = vector.multi_reduction <maximumf>, %13, %cst_11 [1] : vector<8x128xf32> to vector<8xf32>
    %15 = vector.shape_cast %14 : vector<8xf32> to vector<8x1xf32>
    %16 = vector.broadcast %15 : vector<8x1xf32> to vector<8x128xf32>
    %17 = arith.subf %13, %16 : vector<8x128xf32>
    %18 = math.exp %17 : vector<8x128xf32>
    %cst_12 = arith.constant dense<0.000000e+00> : vector<8xf32>
    %19 = vector.multi_reduction <add>, %18, %cst_12 [1] : vector<8x128xf32> to vector<8xf32>
    %20 = vector.shape_cast %19 : vector<8xf32> to vector<8x1xf32>
    %21 = math.log %20 : vector<8x1xf32>
    %c0_13 = arith.constant 0 : index
    %c128 = arith.constant 128 : index
    %22 = vector.load %arg7[%c0_13, %c128] : memref<8x256xf32, #tpu.memory_space<vmem>>, vector<8x128xf32>
    tpu.vector_store %arg7[%c0_13, %c128], %12 {strides = array<i32>} : memref<8x256xf32, #tpu.memory_space<vmem>>, vector<8x128xf32>,
    %c0_14 = arith.constant 0 : index
    %c0_15 = arith.constant 0 : index
    %c0_16 = arith.constant 0 : index
    %23 = vector.load %arg5[%c0_14, %c0_15, %c0_16] : memref<1x8x128xf32, #tpu.memory_space<vmem>>, vector<1x8x128xf32>
    %24 = vector.shape_cast %23 : vector<1x8x128xf32> to vector<8x128xf32>
    %25 = vector.shape_cast %12 : vector<8x128xf32> to vector<1x8x128xf32>
    tpu.vector_store %arg5[%c0_14, %c0_15, %c0_16], %25 {strides = array<i32>} : memref<1x8x128xf32, #tpu.memory_space<vmem>>, vector<1x8x128xf32>,
    %26 = vector.broadcast %21 : vector<8x1xf32> to vector<8x128xf32>
    %27 = arith.subf %17, %26 : vector<8x128xf32>
    %c0_17 = arith.constant 0 : index
    %c0_18 = arith.constant 0 : index
    %c0_19 = arith.constant 0 : index
    %28 = vector.load %arg6[%c0_17, %c0_18, %c0_19] : memref<1x8x128xf32, #tpu.memory_space<vmem>>, vector<1x8x128xf32>
    %29 = vector.shape_cast %28 : vector<1x8x128xf32> to vector<8x128xf32>
    %30 = vector.shape_cast %27 : vector<8x128xf32> to vector<1x8x128xf32>
    tpu.vector_store %arg6[%c0_17, %c0_18, %c0_19], %30 {strides = array<i32>} : memref<1x8x128xf32, #tpu.memory_space<vmem>>, vector<1x8x128xf32>,
    return
  }
  func.func @transform_0(%arg0: i32) -> (i32, i32) {
    %c0_i32 = arith.constant 0 : i32
    %c0_i32_0 = arith.constant 0 : i32
    %c0_i32_1 = arith.constant 0 : i32
    return %c0_i32, %c0_i32_0 : i32, i32
  }
  func.func @transform_1(%arg0: i32) -> (i32, i32, i32) {
    %c0_i32 = arith.constant 0 : i32
    %c0_i32_0 = arith.constant 0 : i32
    %c0_i32_1 = arith.constant 0 : i32
    return %arg0, %c0_i32, %c0_i32_0 : i32, i32, i32
  }
  func.func @transform_2(%arg0: i32) -> (i32, i32) {
    %c0_i32 = arith.constant 0 : i32
    %c0_i32_0 = arith.constant 0 : i32
    %c0_i32_1 = arith.constant 0 : i32
    return %c0_i32, %c0_i32_0 : i32, i32
  }
  func.func @transform_3(%arg0: i32) -> (i32, i32) {
    %c0_i32 = arith.constant 0 : i32
    %c0_i32_0 = arith.constant 0 : i32
    %c0_i32_1 = arith.constant 0 : i32
    return %c0_i32, %c0_i32_0 : i32, i32
  }
  func.func @transform_4(%arg0: i32) -> (i32, i32, i32) {
    %c0_i32 = arith.constant 0 : i32
    %c0_i32_0 = arith.constant 0 : i32
    %c0_i32_1 = arith.constant 0 : i32
    return %arg0, %c0_i32, %c0_i32_0 : i32, i32, i32
  }
  func.func @transform_5(%arg0: i32) -> (i32, i32, i32) {
    %c0_i32 = arith.constant 0 : i32
    %c0_i32_0 = arith.constant 0 : i32
    %c0_i32_1 = arith.constant 0 : i32
    return %arg0, %c0_i32, %c0_i32_0 : i32, i32, i32
  }
}

</mosaic_0001>

<llo_original>
// kernel: _lambda_.1
$region0: #{_lambda_.1}
  #allocation0 [shape = 'u32[]', space=smem, size = 0x4, offset = 0x4, fixed_abs, tag = 'smem constant byte address 0x4 - core index']
  #allocation1 [shape = 'u32[72,128]{1,0:T(1,128)}', space=vmem, size = 0x9000, scoped, tag = 'internal scratch']
  #allocation2 [shape = 'f32[8,256]{1,0:T(8,128)}', space=vmem, size = 0x2000, scoped, tag = 'scratch operand']
  %s0 = inlined_call_operand.vmem [shape: f32[8,128], index: 0, kind: input, shape index: {}]
  %s1 = inlined_call_operand.vmem [shape: f32[16,8,128], index: 1, kind: input, shape index: {}]
  %s2 = inlined_call_operand.hbm [shape: f32[256,256], index: 2, kind: input, shape index: {}]
  %s3 = inlined_call_operand.vmem [shape: f32[1,256], index: 3, kind: input, shape index: {}]
  %s4 = inlined_call_operand.hbm [shape: f32[16,8,128], index: 4, kind: output, shape index: {0}]
  %s5 = inlined_call_operand.vmem [shape: f32[16,8,128], index: 5, kind: output, shape index: {1}]
  %6 = xla_tuple %s4, %s5
  %s7 = sld [smem:[#allocation0]]
  $region65: #{_lambda_.1} parent=0
    _
  %s9 = ssub.s32 1, %s7
  %s10 = scalar_select 0, %s9, %s7
  $region1: #{_lambda_.1} parent=0
    #allocation3 [shape = 'u8[262144]{0}', space=vmem, size = 0x40000, scoped, tag = 'input window, operand 2, single buffered']
    #allocation4 [shape = 's32[2]{0}', space=sflag, size = 0x8, scoped, tag = 'scoped memory for _lambda_.1']
    #allocation5 [shape = 's32[2]{0}', space=sflag, size = 0x8, scoped, tag = 'scoped memory for _lambda_.1']
    #allocation6 [shape = 'u8[8192]{0}', space=vmem, size = 0x2000, scoped, tag = 'output window, operand 0']
    %11 = vsyncpa [#allocation4], 0
    %12 = vsyncpa [#allocation5], 0
    %s13 = scalar_lea.sflag [#allocation5], 1
    %14 = vsyncpa %s13, 0
    loop: start=0, step=1, limit=18
    $region2: #{_lambda_.1} parent=1 // loop_pre_header
      _
    $region3: #{_lambda_.1} parent=1 // loop_header
      %s16 = sphi 0, %s20
      %p17 = scmp.ge.s32.totalorder %s16, 18
      %s24 = sphi 0, %s24
      %s26 = sphi 0, %s24
      %s27 = sphi 0, %s26
      %s41 = sphi 0, %s27
      %s47 = sphi 0, %s49
      %s50 = sphi 0, %s47
      %s51 = sphi 0, %s50
      %s67 = sphi 0, %s51
      %s71 = sphi 0, %s71
      %s73 = sphi 0, %s71
      %s74 = sphi 0, %s73
      %s88 = sphi 0, %s74
      %s92 = sphi 0, %s92
      %s94 = sphi 0, %s92
      %s95 = sphi 0, %s94
      %s109 = sphi 0, %s95
      %s115 = sphi 0, %s117
      %s118 = sphi 0, %s115
      %s119 = sphi 0, %s118
      %s135 = sphi 0, %s119
      %s141 = sphi 0, %s143
      %s144 = sphi 0, %s141
      %s145 = sphi 0, %s144
      %s161 = sphi 0, %s145
    $region4: #{_lambda_.1} parent=1 // loop_header_branch
      %19 = sbr.rel (%p17) target = $region8
    $region5: #{_lambda_.1} parent=1 // loop_body
      %s21 = ssub.s32 %s16, 1
      %s22 = ssub.s32 %s16, 2
      %s23 = sadd.s32 %s16, 1
      %s25 = sadd.s32 %s24, 1
      %p28 = scmp.eq.s32.totalorder %s16, 15
      %p29 = scmp.ne.s32.totalorder %s24, %s26
      %p30 = scmp.eq.s32.totalorder %s16, 0
      %p31 = por %p29, %p30
      %p32 = scmp.ne.s32.totalorder %s24, %s26
      %p33 = scmp.eq.s32.totalorder %s21, 15
      %p34 = por %p32, %p33
      %p35 = scmp.ne.s32.totalorder %s26, %s27
      %p36 = scmp.eq.s32.totalorder %s21, 0
      %p37 = por %p35, %p36
      %p38 = scmp.ne.s32.totalorder %s26, %s27
      %p39 = scmp.eq.s32.totalorder %s22, 15
      %p40 = por %p38, %p39
      %p42 = scmp.ne.s32.totalorder %s27, %s41
      %p43 = scmp.eq.s32.totalorder %s22, 0
      %p44 = por %p42, %p43
      %s45 = ssub.s32 %s16, %s23
      %p46 = scmp.eq.s32.totalorder %s45, 0
      %s48 = sadd.s32 %s47, 1
      %s49 = scalar_select %p46, %s47, %s48
      %p52 = pneg %p46
      %p53 = scmp.eq.s32.totalorder %s16, 15
      %p54 = por %p52, %p53
      %p55 = scmp.ne.s32.totalorder %s47, %s50
      %p56 = scmp.eq.s32.totalorder %s16, 0
      %p57 = por %p55, %p56
      %p58 = scmp.ne.s32.totalorder %s47, %s50
      %p59 = scmp.eq.s32.totalorder %s21, 15
      %p60 = por %p58, %p59
      %p61 = scmp.ne.s32.totalorder %s50, %s51
      %p62 = scmp.eq.s32.totalorder %s21, 0
      %p63 = por %p61, %p62
      %p64 = scmp.ne.s32.totalorder %s50, %s51
      %p65 = scmp.eq.s32.totalorder %s22, 15
      %p66 = por %p64, %p65
      %p68 = scmp.ne.s32.totalorder %s51, %s67
      %p69 = scmp.eq.s32.totalorder %s22, 0
      %p70 = por %p68, %p69
      %s72 = sadd.s32 %s71, 1
      %p75 = scmp.eq.s32.totalorder %s16, 15
      %p76 = scmp.ne.s32.totalorder %s71, %s73
      %p77 = scmp.eq.s32.totalorder %s16, 0
      %p78 = por %p76, %p77
      %p79 = scmp.ne.s32.totalorder %s71, %s73
      %p80 = scmp.eq.s32.totalorder %s21, 15
      %p81 = por %p79, %p80
      %p82 = scmp.ne.s32.totalorder %s73, %s74
      %p83 = scmp.eq.s32.totalorder %s21, 0
      %p84 = por %p82, %p83
      %p85 = scmp.ne.s32.totalorder %s73, %s74
      %p86 = scmp.eq.s32.totalorder %s22, 15
      %p87 = por %p85, %p86
      %p89 = scmp.ne.s32.totalorder %s74, %s88
      %p90 = scmp.eq.s32.totalorder %s22, 0
      %p91 = por %p89, %p90
      %s93 = sadd.s32 %s92, 1
      %p96 = scmp.eq.s32.totalorder %s16, 15
      %p97 = scmp.ne.s32.totalorder %s92, %s94
      %p98 = scmp.eq.s32.totalorder %s16, 0
      %p99 = por %p97, %p98
      %p100 = scmp.ne.s32.totalorder %s92, %s94
      %p101 = scmp.eq.s32.totalorder %s21, 15
      %p102 = por %p100, %p101
      %p103 = scmp.ne.s32.totalorder %s94, %s95
      %p104 = scmp.eq.s32.totalorder %s21, 0
      %p105 = por %p103, %p104
      %p106 = scmp.ne.s32.totalorder %s94, %s95
      %p107 = scmp.eq.s32.totalorder %s22, 15
      %p108 = por %p106, %p107
      %p110 = scmp.ne.s32.totalorder %s95, %s109
      %p111 = scmp.eq.s32.totalorder %s22, 0
      %p112 = por %p110, %p111
      %s113 = ssub.s32 %s16, %s23
      %p114 = scmp.eq.s32.totalorder %s113, 0
      %s116 = sadd.s32 %s115, 1
      %s117 = scalar_select %p114, %s115, %s116
      %p120 = pneg %p114
      %p121 = scmp.eq.s32.totalorder %s16, 15
      %p122 = por %p120, %p121
      %p123 = scmp.ne.s32.totalorder %s115, %s118
      %p124 = scmp.eq.s32.totalorder %s16, 0
      %p125 = por %p123, %p124
      %p126 = scmp.ne.s32.totalorder %s115, %s118
      %p127 = scmp.eq.s32.totalorder %s21, 15
      %p128 = por %p126, %p127
      %p129 = scmp.ne.s32.totalorder %s118, %s119
      %p130 = scmp.eq.s32.totalorder %s21, 0
      %p131 = por %p129, %p130
      %p132 = scmp.ne.s32.totalorder %s118, %s119
      %p133 = scmp.eq.s32.totalorder %s22, 15
      %p134 = por %p132, %p133
      %p136 = scmp.ne.s32.totalorder %s119, %s135
      %p137 = scmp.eq.s32.totalorder %s22, 0
      %p138 = por %p136, %p137
      %s139 = ssub.s32 %s16, %s23
      %p140 = scmp.eq.s32.totalorder %s139, 0
      %s142 = sadd.s32 %s141, 1
      %s143 = scalar_select %p140, %s141, %s142
      %p146 = pneg %p140
      %p147 = scmp.eq.s32.totalorder %s16, 15
      %p148 = por %p146, %p147
      %p149 = scmp.ne.s32.totalorder %s141, %s144
      %p150 = scmp.eq.s32.totalorder %s16, 0
      %p151 = por %p149, %p150
      %p152 = scmp.ne.s32.totalorder %s141, %s144
      %p153 = scmp.eq.s32.totalorder %s21, 15
      %p154 = por %p152, %p153
      %p155 = scmp.ne.s32.totalorder %s144, %s145
      %p156 = scmp.eq.s32.totalorder %s21, 0
      %p157 = por %p155, %p156
      %p158 = scmp.ne.s32.totalorder %s144, %s145
      %p159 = scmp.eq.s32.totalorder %s22, 15
      %p160 = por %p158, %p159
      %p162 = scmp.ne.s32.totalorder %s145, %s161
      %p163 = scmp.eq.s32.totalorder %s22, 0
      %p164 = por %p162, %p163
      %p165 = scmp.le.s32.totalorder 1, %s16
      %p166 = scmp.lt.s32.totalorder %s16, 17
      %p167 = pnand %p165, %p166
      %p168 = pneg %p167
      // Predicated region
      $region9: #{_lambda_.1} parent=5 // pred_check
        _
      $region10: #{_lambda_.1} parent=5 // pred_check_branch
        %170 = sbr.rel (%p167) target = $region12
      $region11: #{_lambda_.1} parent=5 // pred_region
        %s171 = ssub.s32 %s16, 1
        // Predicated region
        $region13: #{_lambda_.1} parent=11 // pred_check
          %p172 = pneg %p37
        $region14: #{_lambda_.1} parent=11 // pred_check_branch
          %174 = sbr.rel (%p172) target = $region16
        $region15: #{_lambda_.1} parent=11 // pred_region
          _
        $region16: #{_lambda_.1} parent=11 // pred_fallthru
          _
        // Predicated region
        $region17: #{_lambda_.1} parent=11 // pred_check
          %p175 = pneg %p84
        $region18: #{_lambda_.1} parent=11 // pred_check_branch
          %177 = sbr.rel (%p175) target = $region20
        $region19: #{_lambda_.1} parent=11 // pred_region
          %179 = vsyncadd [#allocation4], 0
          %s180 = sshll.u32 %s2, 4
          %s181 = int_to_ptr.hbm [resolvable:$true] %s180
          %s182 = sshll.u32 [#allocation3], 4
          %s183 = int_to_ptr.vmem [resolvable:$true] %s182
          %188 = dma.hbm_to_vmem [thread:$0]  %s181, 8192, %s183, [#allocation4], 256, 256, 16
        $region20: #{_lambda_.1} parent=11 // pred_fallthru
          _
        // Predicated region
        $region21: #{_lambda_.1} parent=11 // pred_check
          %p189 = pneg %p105
        $region22: #{_lambda_.1} parent=11 // pred_check_branch
          %191 = sbr.rel (%p189) target = $region24
        $region23: #{_lambda_.1} parent=11 // pred_region
          _
        $region24: #{_lambda_.1} parent=11 // pred_fallthru
          _
      $region12: #{_lambda_.1} parent=5 // pred_fallthru
        _
      %p192 = scmp.lt.s32.totalorder %s16, 16
      // Predicated region
      $region25: #{_lambda_.1} parent=5 // pred_check
        %p193 = pneg %p192
      $region26: #{_lambda_.1} parent=5 // pred_check_branch
        %195 = sbr.rel (%p193) target = $region28
      $region27: #{_lambda_.1} parent=5 // pred_region
        // Predicated region
        $region29: #{_lambda_.1} parent=27 // pred_check
          %p196 = pneg %p57
        $region30: #{_lambda_.1} parent=27 // pred_check_branch
          %198 = sbr.rel (%p196) target = $region32
        $region31: #{_lambda_.1} parent=27 // pred_region
          %p199 = scmp.lt.s32.totalorder %s16, 15
          %s200 = scalar_select %p199, %s16, 15
          %s201 = smul.addr %s200, 8
          %s202 = scalar_lea.vmem %s1, %s201
        $region32: #{_lambda_.1} parent=27 // pred_fallthru
          _
      $region28: #{_lambda_.1} parent=5 // pred_fallthru
        _
      %p203 = scmp.le.s32.totalorder 1, %s16
      %p204 = scmp.lt.s32.totalorder %s16, 17
      %p205 = pnand %p203, %p204
      %p206 = pneg %p205
      // Predicated region
      $region33: #{_lambda_.1} parent=5 // pred_check
        _
      $region34: #{_lambda_.1} parent=5 // pred_check_branch
        %208 = sbr.rel (%p205) target = $region36
      $region35: #{_lambda_.1} parent=5 // pred_region
        %s209 = ssub.s32 %s16, 1
        // Predicated region
        $region37: #{_lambda_.1} parent=35 // pred_check
          %p210 = pneg %p84
        $region38: #{_lambda_.1} parent=35 // pred_check_branch
          %212 = sbr.rel (%p210) target = $region40
        $region39: #{_lambda_.1} parent=35 // pred_region
          %214 = dma.done [#allocation4], 8192
        $region40: #{_lambda_.1} parent=35 // pred_fallthru
          _
        %p215 = pneg %p37
        %p216 = pneg %p34
        %p217 = scmp.lt.s32.totalorder %s21, 15
        %s218 = scalar_select %p217, %s21, 15
        %s219 = smul.addr %s218, 8
        %s220 = scalar_lea.vmem %s1, %s219
        %p221 = pneg %p63
        %p222 = pneg %p60
        %p223 = pneg %p84
        %p224 = pneg %p81
        %p225 = pneg %p105
        %p226 = pneg %p102
        %p227 = pneg %p131
        %p228 = pneg %p128
        %s229 = sand.u32 %s118, 1
        %s230 = scalar_lea.sflag [#allocation5], %s229
        %s231 = sand.u32 %s118, 1
        %s232 = smul.addr %s231, 8
        %s233 = scalar_lea.vmem [#allocation6], %s232
        %p234 = pneg %p157
        %p235 = pneg %p154
        %p236 = scmp.lt.s32.totalorder %s21, 15
        %s237 = scalar_select %p236, %s21, 15
        %s238 = smul.addr %s237, 8
        %s239 = scalar_lea.vmem %s5, %s238
        %p240 = scmp.lt.s32.totalorder %s21, 15
        %s241 = scalar_select %p240, %s21, 15
        %s242 = smul.addr %s241, 8
        %s243 = scalar_lea.vmem %s1, %s242
        %p244 = scmp.lt.s32.totalorder %s21, 15
        %s245 = scalar_select %p244, %s21, 15
        %s246 = smul.addr %s245, 8
        %s247 = scalar_lea.vmem %s5, %s246
        %p248 = scmp.eq.s32.totalorder %s21, 0
        // Predicated region
        $region41: #{_lambda_.1} parent=35 // pred_check
          %p249 = pneg %p248
        $region42: #{_lambda_.1} parent=35 // pred_check_branch
          %251 = sbr.rel (%p249) target = $region44
        $region43: #{_lambda_.1} parent=35 // pred_region
          %v252 = vld [vmem:[%s0] sm:$0xff]
          %253 = vst [vmem:[#allocation2 + $0x8] sm:$0xff] %v252
        $region44: #{_lambda_.1} parent=35 // pred_fallthru
          _
        %v254 = vld [vmem:[%s243] sm:$0xff]
        %255 = vst [vmem:[#allocation2] sm:$0xff] %v254
        %v256 = vld [vmem:[#allocation2] sm:$0xff]
        %v257 = vld [vmem:[#allocation2 + $0x8] sm:$0xff]
        %v258 = vld [vmem:[#allocation3] sm:$0xff]
        %v259 = vld [vmem:[#allocation3 + $0x8] sm:$0xff]
        %v260 = vld [vmem:[#allocation3 + $0x10] sm:$0xff]
        %v261 = vld [vmem:[#allocation3 + $0x18] sm:$0xff]
        %v262 = vld [vmem:[#allocation3 + $0x20] sm:$0xff]
        %v263 = vld [vmem:[#allocation3 + $0x28] sm:$0xff]
        %v264 = vld [vmem:[#allocation3 + $0x30] sm:$0xff]
        %v265 = vld [vmem:[#allocation3 + $0x38] sm:$0xff]
        %v266 = vld [vmem:[#allocation3 + $0x40] sm:$0xff]
        %v267 = vld [vmem:[#allocation3 + $0x48] sm:$0xff]
        %v268 = vld [vmem:[#allocation3 + $0x50] sm:$0xff]
        %v269 = vld [vmem:[#allocation3 + $0x58] sm:$0xff]
        %v270 = vld [vmem:[#allocation3 + $0x60] sm:$0xff]
        %v271 = vld [vmem:[#allocation3 + $0x68] sm:$0xff]
        %v272 = vld [vmem:[#allocation3 + $0x70] sm:$0xff]
        %v273 = vld [vmem:[#allocation3 + $0x78] sm:$0xff]
        %v274 = vld [vmem:[#allocation3 + $0x80] sm:$0xff]
        %v275 = vld [vmem:[#allocation3 + $0x88] sm:$0xff]
        %v276 = vld [vmem:[#allocation3 + $0x90] sm:$0xff]
        %v277 = vld [vmem:[#allocation3 + $0x98] sm:$0xff]
        %v278 = vld [vmem:[#allocation3 + $0xa0] sm:$0xff]
        %v279 = vld [vmem:[#allocation3 + $0xa8] sm:$0xff]
        %v280 = vld [vmem:[#allocation3 + $0xb0] sm:$0xff]
        %v281 = vld [vmem:[#allocation3 + $0xb8] sm:$0xff]
        %v282 = vld [vmem:[#allocation3 + $0xc0] sm:$0xff]
        %v283 = vld [vmem:[#allocation3 + $0xc8] sm:$0xff]
        %v284 = vld [vmem:[#allocation3 + $0xd0] sm:$0xff]
        %v285 = vld [vmem:[#allocation3 + $0xd8] sm:$0xff]
        %v286 = vld [vmem:[#allocation3 + $0xe0] sm:$0xff]
        %v287 = vld [vmem:[#allocation3 + $0xe8] sm:$0xff]
        %v288 = vld [vmem:[#allocation3 + $0xf0] sm:$0xff]
        %v289 = vld [vmem:[#allocation3 + $0xf8] sm:$0xff]
        %v290 = vld [vmem:[#allocation3 + $0x100] sm:$0xff]
        %v291 = vld [vmem:[#allocation3 + $0x108] sm:$0xff]
        %v292 = vld [vmem:[#allocation3 + $0x110] sm:$0xff]
        %v293 = vld [vmem:[#allocation3 + $0x118] sm:$0xff]
        %v294 = vld [vmem:[#allocation3 + $0x120] sm:$0xff]
        %v295 = vld [vmem:[#allocation3 + $0x128] sm:$0xff]
        %v296 = vld [vmem:[#allocation3 + $0x130] sm:$0xff]
        %v297 = vld [vmem:[#allocation3 + $0x138] sm:$0xff]
        %v298 = vld [vmem:[#allocation3 + $0x140] sm:$0xff]
        %v299 = vld [vmem:[#allocation3 + $0x148] sm:$0xff]
        %v300 = vld [vmem:[#allocation3 + $0x150] sm:$0xff]
        %v301 = vld [vmem:[#allocation3 + $0x158] sm:$0xff]
        %v302 = vld [vmem:[#allocation3 + $0x160] sm:$0xff]
        %v303 = vld [vmem:[#allocation3 + $0x168] sm:$0xff]
        %v304 = vld [vmem:[#allocation3 + $0x170] sm:$0xff]
        %v305 = vld [vmem:[#allocation3 + $0x178] sm:$0xff]
        %v306 = vld [vmem:[#allocation3 + $0x180] sm:$0xff]
        %v307 = vld [vmem:[#allocation3 + $0x188] sm:$0xff]
        %v308 = vld [vmem:[#allocation3 + $0x190] sm:$0xff]
        %v309 = vld [vmem:[#allocation3 + $0x198] sm:$0xff]
        %v310 = vld [vmem:[#allocation3 + $0x1a0] sm:$0xff]
        %v311 = vld [vmem:[#allocation3 + $0x1a8] sm:$0xff]
        %v312 = vld [vmem:[#allocation3 + $0x1b0] sm:$0xff]
        %v313 = vld [vmem:[#allocation3 + $0x1b8] sm:$0xff]
        %v314 = vld [vmem:[#allocation3 + $0x1c0] sm:$0xff]
        %v315 = vld [vmem:[#allocation3 + $0x1c8] sm:$0xff]
        %v316 = vld [vmem:[#allocation3 + $0x1d0] sm:$0xff]
        %v317 = vld [vmem:[#allocation3 + $0x1d8] sm:$0xff]
        %v318 = vld [vmem:[#allocation3 + $0x1e0] sm:$0xff]
        %v319 = vld [vmem:[#allocation3 + $0x1e8] sm:$0xff]
        %v320 = vld [vmem:[#allocation3 + $0x1f0] sm:$0xff]
        %v321 = vld [vmem:[#allocation3 + $0x1f8] sm:$0xff]
        %v322 = vld [vmem:[%s3] sm:$0x3]
        %v324 = vperm.slane %v322, 0
        %v325 = vperm.slane %v322, 1
        %v328 = vand.u32 %v288, 4294901760
        %329 = vmatpush.msra.mxu0 %v328
        %v330 = vand.u32 %v286, 4294901760
        %331 = vmatpush.msra.mxu0 %v330
        %v332 = vand.u32 %v284, 4294901760
        %333 = vmatpush.msra.mxu0 %v332
        %v334 = vand.u32 %v282, 4294901760
        %335 = vmatpush.msra.mxu0 %v334
        %v336 = vand.u32 %v280, 4294901760
        %337 = vmatpush.msra.mxu0 %v336
        %v338 = vand.u32 %v278, 4294901760
        %339 = vmatpush.msra.mxu0 %v338
        %v340 = vand.u32 %v276, 4294901760
        %341 = vmatpush.msra.mxu0 %v340
        %v342 = vand.u32 %v274, 4294901760
        %343 = vmatpush.msra.mxu0 %v342
        %v344 = vand.u32 %v272, 4294901760
        %345 = vmatpush.msra.mxu0 %v344
        %v346 = vand.u32 %v270, 4294901760
        %347 = vmatpush.msra.mxu0 %v346
        %v348 = vand.u32 %v268, 4294901760
        %349 = vmatpush.msra.mxu0 %v348
        %v350 = vand.u32 %v266, 4294901760
        %351 = vmatpush.msra.mxu0 %v350
        %v352 = vand.u32 %v264, 4294901760
        %353 = vmatpush.msra.mxu0 %v352
        %v354 = vand.u32 %v262, 4294901760
        %355 = vmatpush.msra.mxu0 %v354
        %v356 = vand.u32 %v260, 4294901760
        %357 = vmatpush.msra.mxu0 %v356
        %v358 = vand.u32 %v258, 4294901760
        %359 = vmatpush.msra.mxu0 %v358
        %v360 = vand.u32 %v256, 4294901760
        %v361 = vsub.f32 %v256, %v360
        %v362 = vand.u32 %v361, 4294901760
        %v363 = vsub.f32 %v361, %v362
        %v364 = vand.u32 %v363, 4294901760
        %365 = vmatmul.f32.gmra.mxu0 %v364
        %v366 = vpop.f32.mrf.mxu0
        %v367 = vadd.f32 %v324, %v366
        %368 = vdwg.mxu0
        %v369 = vand.u32 %v288, 4294901760
        %v370 = vsub.f32 %v288, %v369
        %v371 = vand.u32 %v370, 4294901760
        %v372 = vsub.f32 %v370, %v371
        %v373 = vand.u32 %v372, 4294901760
        %374 = vmatpush.msra.mxu0 %v373
        %v375 = vand.u32 %v286, 4294901760
        %v376 = vsub.f32 %v286, %v375
        %v377 = vand.u32 %v376, 4294901760
        %v378 = vsub.f32 %v376, %v377
        %v379 = vand.u32 %v378, 4294901760
        %380 = vmatpush.msra.mxu0 %v379
        %v381 = vand.u32 %v284, 4294901760
        %v382 = vsub.f32 %v284, %v381
        %v383 = vand.u32 %v382, 4294901760
        %v384 = vsub.f32 %v382, %v383
        %v385 = vand.u32 %v384, 4294901760
        %386 = vmatpush.msra.mxu0 %v385
        %v387 = vand.u32 %v282, 4294901760
        %v388 = vsub.f32 %v282, %v387
        %v389 = vand.u32 %v388, 4294901760
        %v390 = vsub.f32 %v388, %v389
        %v391 = vand.u32 %v390, 4294901760
        %392 = vmatpush.msra.mxu0 %v391
        %v393 = vand.u32 %v280, 4294901760
        %v394 = vsub.f32 %v280, %v393
        %v395 = vand.u32 %v394, 4294901760
        %v396 = vsub.f32 %v394, %v395
        %v397 = vand.u32 %v396, 4294901760
        %398 = vmatpush.msra.mxu0 %v397
        %v399 = vand.u32 %v278, 4294901760
        %v400 = vsub.f32 %v278, %v399
        %v401 = vand.u32 %v400, 4294901760
        %v402 = vsub.f32 %v400, %v401
        %v403 = vand.u32 %v402, 4294901760
        %404 = vmatpush.msra.mxu0 %v403
        %v405 = vand.u32 %v276, 4294901760
        %v406 = vsub.f32 %v276, %v405
        %v407 = vand.u32 %v406, 4294901760
        %v408 = vsub.f32 %v406, %v407
        %v409 = vand.u32 %v408, 4294901760
        %410 = vmatpush.msra.mxu0 %v409
        %v411 = vand.u32 %v274, 4294901760
        %v412 = vsub.f32 %v274, %v411
        %v413 = vand.u32 %v412, 4294901760
        %v414 = vsub.f32 %v412, %v413
        %v415 = vand.u32 %v414, 4294901760
        %416 = vmatpush.msra.mxu0 %v415
        %v417 = vand.u32 %v272, 4294901760
        %v418 = vsub.f32 %v272, %v417
        %v419 = vand.u32 %v418, 4294901760
        %v420 = vsub.f32 %v418, %v419
        %v421 = vand.u32 %v420, 4294901760
        %422 = vmatpush.msra.mxu0 %v421
        %v423 = vand.u32 %v270, 4294901760
        %v424 = vsub.f32 %v270, %v423
        %v425 = vand.u32 %v424, 4294901760
        %v426 = vsub.f32 %v424, %v425
        %v427 = vand.u32 %v426, 4294901760
        %428 = vmatpush.msra.mxu0 %v427
        %v429 = vand.u32 %v268, 4294901760
        %v430 = vsub.f32 %v268, %v429
        %v431 = vand.u32 %v430, 4294901760
        %v432 = vsub.f32 %v430, %v431
        %v433 = vand.u32 %v432, 4294901760
        %434 = vmatpush.msra.mxu0 %v433
        %v435 = vand.u32 %v266, 4294901760
        %v436 = vsub.f32 %v266, %v435
        %v437 = vand.u32 %v436, 4294901760
        %v438 = vsub.f32 %v436, %v437
        %v439 = vand.u32 %v438, 4294901760
        %440 = vmatpush.msra.mxu0 %v439
        %v441 = vand.u32 %v264, 4294901760
        %v442 = vsub.f32 %v264, %v441
        %v443 = vand.u32 %v442, 4294901760
        %v444 = vsub.f32 %v442, %v443
        %v445 = vand.u32 %v444, 4294901760
        %446 = vmatpush.msra.mxu0 %v445
        %v447 = vand.u32 %v262, 4294901760
        %v448 = vsub.f32 %v262, %v447
        %v449 = vand.u32 %v448, 4294901760
        %v450 = vsub.f32 %v448, %v449
        %v451 = vand.u32 %v450, 4294901760
        %452 = vmatpush.msra.mxu0 %v451
        %v453 = vand.u32 %v260, 4294901760
        %v454 = vsub.f32 %v260, %v453
        %v455 = vand.u32 %v454, 4294901760
        %v456 = vsub.f32 %v454, %v455
        %v457 = vand.u32 %v456, 4294901760
        %458 = vmatpush.msra.mxu0 %v457
        %v459 = vand.u32 %v258, 4294901760
        %v460 = vsub.f32 %v258, %v459
        %v461 = vand.u32 %v460, 4294901760
        %v462 = vsub.f32 %v460, %v461
        %v463 = vand.u32 %v462, 4294901760
        %464 = vmatpush.msra.mxu0 %v463
        %v465 = vand.u32 %v256, 4294901760
        %466 = vmatmul.f32.gmra.mxu0 %v465
        %v467 = vpop.f32.mrf.mxu0
        %v468 = vadd.f32 %v367, %v467
        %469 = vdwg.mxu0
        %v470 = vand.u32 %v288, 4294901760
        %v471 = vsub.f32 %v288, %v470
        %472 = vmatpush.msra.mxu0 %v471
        %v473 = vand.u32 %v286, 4294901760
        %v474 = vsub.f32 %v286, %v473
        %475 = vmatpush.msra.mxu0 %v474
        %v476 = vand.u32 %v284, 4294901760
        %v477 = vsub.f32 %v284, %v476
        %478 = vmatpush.msra.mxu0 %v477
        %v479 = vand.u32 %v282, 4294901760
        %v480 = vsub.f32 %v282, %v479
        %481 = vmatpush.msra.mxu0 %v480
        %v482 = vand.u32 %v280, 4294901760
        %v483 = vsub.f32 %v280, %v482
        %484 = vmatpush.msra.mxu0 %v483
        %v485 = vand.u32 %v278, 4294901760
        %v486 = vsub.f32 %v278, %v485
        %487 = vmatpush.msra.mxu0 %v486
        %v488 = vand.u32 %v276, 4294901760
        %v489 = vsub.f32 %v276, %v488
        %490 = vmatpush.msra.mxu0 %v489
        %v491 = vand.u32 %v274, 4294901760
        %v492 = vsub.f32 %v274, %v491
        %493 = vmatpush.msra.mxu0 %v492
        %v494 = vand.u32 %v272, 4294901760
        %v495 = vsub.f32 %v272, %v494
        %496 = vmatpush.msra.mxu0 %v495
        %v497 = vand.u32 %v270, 4294901760
        %v498 = vsub.f32 %v270, %v497
        %499 = vmatpush.msra.mxu0 %v498
        %v500 = vand.u32 %v268, 4294901760
        %v501 = vsub.f32 %v268, %v500
        %502 = vmatpush.msra.mxu0 %v501
        %v503 = vand.u32 %v266, 4294901760
        %v504 = vsub.f32 %v266, %v503
        %505 = vmatpush.msra.mxu0 %v504
        %v506 = vand.u32 %v264, 4294901760
        %v507 = vsub.f32 %v264, %v506
        %508 = vmatpush.msra.mxu0 %v507
        %v509 = vand.u32 %v262, 4294901760
        %v510 = vsub.f32 %v262, %v509
        %511 = vmatpush.msra.mxu0 %v510
        %v512 = vand.u32 %v260, 4294901760
        %v513 = vsub.f32 %v260, %v512
        %514 = vmatpush.msra.mxu0 %v513
        %v515 = vand.u32 %v258, 4294901760
        %v516 = vsub.f32 %v258, %v515
        %517 = vmatpush.msra.mxu0 %v516
        %v518 = vand.u32 %v256, 4294901760
        %v519 = vsub.f32 %v256, %v518
        %520 = vmatmul.f32.gmra.mxu0 %v519
        %v521 = vpop.f32.mrf.mxu0
        %v522 = vadd.f32 %v468, %v521
        %523 = vdwg.mxu0
        %v524 = vand.u32 %v288, 4294901760
        %525 = vmatpush.msra.mxu0 %v524
        %v526 = vand.u32 %v286, 4294901760
        %527 = vmatpush.msra.mxu0 %v526
        %v528 = vand.u32 %v284, 4294901760
        %529 = vmatpush.msra.mxu0 %v528
        %v530 = vand.u32 %v282, 4294901760
        %531 = vmatpush.msra.mxu0 %v530
        %v532 = vand.u32 %v280, 4294901760
        %533 = vmatpush.msra.mxu0 %v532
        %v534 = vand.u32 %v278, 4294901760
        %535 = vmatpush.msra.mxu0 %v534
        %v536 = vand.u32 %v276, 4294901760
        %537 = vmatpush.msra.mxu0 %v536
        %v538 = vand.u32 %v274, 4294901760
        %539 = vmatpush.msra.mxu0 %v538
        %v540 = vand.u32 %v272, 4294901760
        %541 = vmatpush.msra.mxu0 %v540
        %v542 = vand.u32 %v270, 4294901760
        %543 = vmatpush.msra.mxu0 %v542
        %v544 = vand.u32 %v268, 4294901760
        %545 = vmatpush.msra.mxu0 %v544
        %v546 = vand.u32 %v266, 4294901760
        %547 = vmatpush.msra.mxu0 %v546
        %v548 = vand.u32 %v264, 4294901760
        %549 = vmatpush.msra.mxu0 %v548
        %v550 = vand.u32 %v262, 4294901760
        %551 = vmatpush.msra.mxu0 %v550
        %v552 = vand.u32 %v260, 4294901760
        %553 = vmatpush.msra.mxu0 %v552
        %v554 = vand.u32 %v258, 4294901760
        %555 = vmatpush.msra.mxu0 %v554
        %v556 = vand.u32 %v256, 4294901760
        %v557 = vsub.f32 %v256, %v556
        %v558 = vand.u32 %v557, 4294901760
        %559 = vmatmul.f32.gmra.mxu0 %v558
        %v560 = vpop.f32.mrf.mxu0
        %v561 = vadd.f32 %v522, %v560
        %562 = vdwg.mxu0
        %v563 = vand.u32 %v288, 4294901760
        %v564 = vsub.f32 %v288, %v563
        %v565 = vand.u32 %v564, 4294901760
        %566 = vmatpush.msra.mxu0 %v565
        %v567 = vand.u32 %v286, 4294901760
        %v568 = vsub.f32 %v286, %v567
        %v569 = vand.u32 %v568, 4294901760
        %570 = vmatpush.msra.mxu0 %v569
        %v571 = vand.u32 %v284, 4294901760
        %v572 = vsub.f32 %v284, %v571
        %v573 = vand.u32 %v572, 4294901760
        %574 = vmatpush.msra.mxu0 %v573
        %v575 = vand.u32 %v282, 4294901760
        %v576 = vsub.f32 %v282, %v575
        %v577 = vand.u32 %v576, 4294901760
        %578 = vmatpush.msra.mxu0 %v577
        %v579 = vand.u32 %v280, 4294901760
        %v580 = vsub.f32 %v280, %v579
        %v581 = vand.u32 %v580, 4294901760
        %582 = vmatpush.msra.mxu0 %v581
        %v583 = vand.u32 %v278, 4294901760
        %v584 = vsub.f32 %v278, %v583
        %v585 = vand.u32 %v584, 4294901760
        %586 = vmatpush.msra.mxu0 %v585
        %v587 = vand.u32 %v276, 4294901760
        %v588 = vsub.f32 %v276, %v587
        %v589 = vand.u32 %v588, 4294901760
        %590 = vmatpush.msra.mxu0 %v589
        %v591 = vand.u32 %v274, 4294901760
        %v592 = vsub.f32 %v274, %v591
        %v593 = vand.u32 %v592, 4294901760
        %594 = vmatpush.msra.mxu0 %v593
        %v595 = vand.u32 %v272, 4294901760
        %v596 = vsub.f32 %v272, %v595
        %v597 = vand.u32 %v596, 4294901760
        %598 = vmatpush.msra.mxu0 %v597
        %v599 = vand.u32 %v270, 4294901760
        %v600 = vsub.f32 %v270, %v599
        %v601 = vand.u32 %v600, 4294901760
        %602 = vmatpush.msra.mxu0 %v601
        %v603 = vand.u32 %v268, 4294901760
        %v604 = vsub.f32 %v268, %v603
        %v605 = vand.u32 %v604, 4294901760
        %606 = vmatpush.msra.mxu0 %v605
        %v607 = vand.u32 %v266, 4294901760
        %v608 = vsub.f32 %v266, %v607
        %v609 = vand.u32 %v608, 4294901760
        %610 = vmatpush.msra.mxu0 %v609
        %v611 = vand.u32 %v264, 4294901760
        %v612 = vsub.f32 %v264, %v611
        %v613 = vand.u32 %v612, 4294901760
        %614 = vmatpush.msra.mxu0 %v613
        %v615 = vand.u32 %v262, 4294901760
        %v616 = vsub.f32 %v262, %v615
        %v617 = vand.u32 %v616, 4294901760
        %618 = vmatpush.msra.mxu0 %v617
        %v619 = vand.u32 %v260, 4294901760
        %v620 = vsub.f32 %v260, %v619
        %v621 = vand.u32 %v620, 4294901760
        %622 = vmatpush.msra.mxu0 %v621
        %v623 = vand.u32 %v258, 4294901760
        %v624 = vsub.f32 %v258, %v623
        %v625 = vand.u32 %v624, 4294901760
        %626 = vmatpush.msra.mxu0 %v625
        %v627 = vand.u32 %v256, 4294901760
        %628 = vmatmul.f32.gmra.mxu0 %v627
        %v629 = vpop.f32.mrf.mxu0
        %v630 = vadd.f32 %v561, %v629
        %631 = vdwg.mxu0
        %v632 = vand.u32 %v288, 4294901760
        %633 = vmatpush.msra.mxu0 %v632
        %v634 = vand.u32 %v286, 4294901760
        %635 = vmatpush.msra.mxu0 %v634
        %v636 = vand.u32 %v284, 4294901760
        %637 = vmatpush.msra.mxu0 %v636
        %v638 = vand.u32 %v282, 4294901760
        %639 = vmatpush.msra.mxu0 %v638
        %v640 = vand.u32 %v280, 4294901760
        %641 = vmatpush.msra.mxu0 %v640
        %v642 = vand.u32 %v278, 4294901760
        %643 = vmatpush.msra.mxu0 %v642
        %v644 = vand.u32 %v276, 4294901760
        %645 = vmatpush.msra.mxu0 %v644
        %v646 = vand.u32 %v274, 4294901760
        %647 = vmatpush.msra.mxu0 %v646
        %v648 = vand.u32 %v272, 4294901760
        %649 = vmatpush.msra.mxu0 %v648
        %v650 = vand.u32 %v270, 4294901760
        %651 = vmatpush.msra.mxu0 %v650
        %v652 = vand.u32 %v268, 4294901760
        %653 = vmatpush.msra.mxu0 %v652
        %v654 = vand.u32 %v266, 4294901760
        %655 = vmatpush.msra.mxu0 %v654
        %v656 = vand.u32 %v264, 4294901760
        %657 = vmatpush.msra.mxu0 %v656
        %v658 = vand.u32 %v262, 4294901760
        %659 = vmatpush.msra.mxu0 %v658
        %v660 = vand.u32 %v260, 4294901760
        %661 = vmatpush.msra.mxu0 %v660
        %v662 = vand.u32 %v258, 4294901760
        %663 = vmatpush.msra.mxu0 %v662
        %v664 = vand.u32 %v256, 4294901760
        %665 = vmatmul.f32.gmra.mxu0 %v664
        %v666 = vpop.f32.mrf.mxu0
        %v667 = vadd.f32 %v630, %v666
        %668 = vdwg.mxu0
        %v669 = vand.u32 %v320, 4294901760
        %670 = vmatpush.msra.mxu0 %v669
        %v671 = vand.u32 %v318, 4294901760
        %672 = vmatpush.msra.mxu0 %v671
        %v673 = vand.u32 %v316, 4294901760
        %674 = vmatpush.msra.mxu0 %v673
        %v675 = vand.u32 %v314, 4294901760
        %676 = vmatpush.msra.mxu0 %v675
        %v677 = vand.u32 %v312, 4294901760
        %678 = vmatpush.msra.mxu0 %v677
        %v679 = vand.u32 %v310, 4294901760
        %680 = vmatpush.msra.mxu0 %v679
        %v681 = vand.u32 %v308, 4294901760
        %682 = vmatpush.msra.mxu0 %v681
        %v683 = vand.u32 %v306, 4294901760
        %684 = vmatpush.msra.mxu0 %v683
        %v685 = vand.u32 %v304, 4294901760
        %686 = vmatpush.msra.mxu0 %v685
        %v687 = vand.u32 %v302, 4294901760
        %688 = vmatpush.msra.mxu0 %v687
        %v689 = vand.u32 %v300, 4294901760
        %690 = vmatpush.msra.mxu0 %v689
        %v691 = vand.u32 %v298, 4294901760
        %692 = vmatpush.msra.mxu0 %v691
        %v693 = vand.u32 %v296, 4294901760
        %694 = vmatpush.msra.mxu0 %v693
        %v695 = vand.u32 %v294, 4294901760
        %696 = vmatpush.msra.mxu0 %v695
        %v697 = vand.u32 %v292, 4294901760
        %698 = vmatpush.msra.mxu0 %v697
        %v699 = vand.u32 %v290, 4294901760
        %700 = vmatpush.msra.mxu0 %v699
        %v701 = vand.u32 %v257, 4294901760
        %v702 = vsub.f32 %v257, %v701
        %v703 = vand.u32 %v702, 4294901760
        %v704 = vsub.f32 %v702, %v703
        %v705 = vand.u32 %v704, 4294901760
        %706 = vmatmul.f32.gmra.mxu0 %v705
        %v707 = vpop.f32.mrf.mxu0
        %v708 = vadd.f32 %v667, %v707
        %709 = vdwg.mxu0
        %v710 = vand.u32 %v320, 4294901760
        %v711 = vsub.f32 %v320, %v710
        %v712 = vand.u32 %v711, 4294901760
        %v713 = vsub.f32 %v711, %v712
        %v714 = vand.u32 %v713, 4294901760
        %715 = vmatpush.msra.mxu0 %v714
        %v716 = vand.u32 %v318, 4294901760
        %v717 = vsub.f32 %v318, %v716
        %v718 = vand.u32 %v717, 4294901760
        %v719 = vsub.f32 %v717, %v718
        %v720 = vand.u32 %v719, 4294901760
        %721 = vmatpush.msra.mxu0 %v720
        %v722 = vand.u32 %v316, 4294901760
        %v723 = vsub.f32 %v316, %v722
        %v724 = vand.u32 %v723, 4294901760
        %v725 = vsub.f32 %v723, %v724
        %v726 = vand.u32 %v725, 4294901760
        %727 = vmatpush.msra.mxu0 %v726
        %v728 = vand.u32 %v314, 4294901760
        %v729 = vsub.f32 %v314, %v728
        %v730 = vand.u32 %v729, 4294901760
        %v731 = vsub.f32 %v729, %v730
        %v732 = vand.u32 %v731, 4294901760
        %733 = vmatpush.msra.mxu0 %v732
        %v734 = vand.u32 %v312, 4294901760
        %v735 = vsub.f32 %v312, %v734
        %v736 = vand.u32 %v735, 4294901760
        %v737 = vsub.f32 %v735, %v736
        %v738 = vand.u32 %v737, 4294901760
        %739 = vmatpush.msra.mxu0 %v738
        %v740 = vand.u32 %v310, 4294901760
        %v741 = vsub.f32 %v310, %v740
        %v742 = vand.u32 %v741, 4294901760
        %v743 = vsub.f32 %v741, %v742
        %v744 = vand.u32 %v743, 4294901760
        %745 = vmatpush.msra.mxu0 %v744
        %v746 = vand.u32 %v308, 4294901760
        %v747 = vsub.f32 %v308, %v746
        %v748 = vand.u32 %v747, 4294901760
        %v749 = vsub.f32 %v747, %v748
        %v750 = vand.u32 %v749, 4294901760
        %751 = vmatpush.msra.mxu0 %v750
        %v752 = vand.u32 %v306, 4294901760
        %v753 = vsub.f32 %v306, %v752
        %v754 = vand.u32 %v753, 4294901760
        %v755 = vsub.f32 %v753, %v754
        %v756 = vand.u32 %v755, 4294901760
        %757 = vmatpush.msra.mxu0 %v756
        %v758 = vand.u32 %v304, 4294901760
        %v759 = vsub.f32 %v304, %v758
        %v760 = vand.u32 %v759, 4294901760
        %v761 = vsub.f32 %v759, %v760
        %v762 = vand.u32 %v761, 4294901760
        %763 = vmatpush.msra.mxu0 %v762
        %v764 = vand.u32 %v302, 4294901760
        %v765 = vsub.f32 %v302, %v764
        %v766 = vand.u32 %v765, 4294901760
        %v767 = vsub.f32 %v765, %v766
        %v768 = vand.u32 %v767, 4294901760
        %769 = vmatpush.msra.mxu0 %v768
        %v770 = vand.u32 %v300, 4294901760
        %v771 = vsub.f32 %v300, %v770
        %v772 = vand.u32 %v771, 4294901760
        %v773 = vsub.f32 %v771, %v772
        %v774 = vand.u32 %v773, 4294901760
        %775 = vmatpush.msra.mxu0 %v774
        %v776 = vand.u32 %v298, 4294901760
        %v777 = vsub.f32 %v298, %v776
        %v778 = vand.u32 %v777, 4294901760
        %v779 = vsub.f32 %v777, %v778
        %v780 = vand.u32 %v779, 4294901760
        %781 = vmatpush.msra.mxu0 %v780
        %v782 = vand.u32 %v296, 4294901760
        %v783 = vsub.f32 %v296, %v782
        %v784 = vand.u32 %v783, 4294901760
        %v785 = vsub.f32 %v783, %v784
        %v786 = vand.u32 %v785, 4294901760
        %787 = vmatpush.msra.mxu0 %v786
        %v788 = vand.u32 %v294, 4294901760
        %v789 = vsub.f32 %v294, %v788
        %v790 = vand.u32 %v789, 4294901760
        %v791 = vsub.f32 %v789, %v790
        %v792 = vand.u32 %v791, 4294901760
        %793 = vmatpush.msra.mxu0 %v792
        %v794 = vand.u32 %v292, 4294901760
        %v795 = vsub.f32 %v292, %v794
        %v796 = vand.u32 %v795, 4294901760
        %v797 = vsub.f32 %v795, %v796
        %v798 = vand.u32 %v797, 4294901760
        %799 = vmatpush.msra.mxu0 %v798
        %v800 = vand.u32 %v290, 4294901760
        %v801 = vsub.f32 %v290, %v800
        %v802 = vand.u32 %v801, 4294901760
        %v803 = vsub.f32 %v801, %v802
        %v804 = vand.u32 %v803, 4294901760
        %805 = vmatpush.msra.mxu0 %v804
        %v806 = vand.u32 %v257, 4294901760
        %807 = vmatmul.f32.gmra.mxu0 %v806
        %v808 = vpop.f32.mrf.mxu0
        %v809 = vadd.f32 %v708, %v808
        %810 = vdwg.mxu0
        %v811 = vand.u32 %v320, 4294901760
        %v812 = vsub.f32 %v320, %v811
        %813 = vmatpush.msra.mxu0 %v812
        %v814 = vand.u32 %v318, 4294901760
        %v815 = vsub.f32 %v318, %v814
        %816 = vmatpush.msra.mxu0 %v815
        %v817 = vand.u32 %v316, 4294901760
        %v818 = vsub.f32 %v316, %v817
        %819 = vmatpush.msra.mxu0 %v818
        %v820 = vand.u32 %v314, 4294901760
        %v821 = vsub.f32 %v314, %v820
        %822 = vmatpush.msra.mxu0 %v821
        %v823 = vand.u32 %v312, 4294901760
        %v824 = vsub.f32 %v312, %v823
        %825 = vmatpush.msra.mxu0 %v824
        %v826 = vand.u32 %v310, 4294901760
        %v827 = vsub.f32 %v310, %v826
        %828 = vmatpush.msra.mxu0 %v827
        %v829 = vand.u32 %v308, 4294901760
        %v830 = vsub.f32 %v308, %v829
        %831 = vmatpush.msra.mxu0 %v830
        %v832 = vand.u32 %v306, 4294901760
        %v833 = vsub.f32 %v306, %v832
        %834 = vmatpush.msra.mxu0 %v833
        %v835 = vand.u32 %v304, 4294901760
        %v836 = vsub.f32 %v304, %v835
        %837 = vmatpush.msra.mxu0 %v836
        %v838 = vand.u32 %v302, 4294901760
        %v839 = vsub.f32 %v302, %v838
        %840 = vmatpush.msra.mxu0 %v839
        %v841 = vand.u32 %v300, 4294901760
        %v842 = vsub.f32 %v300, %v841
        %843 = vmatpush.msra.mxu0 %v842
        %v844 = vand.u32 %v298, 4294901760
        %v845 = vsub.f32 %v298, %v844
        %846 = vmatpush.msra.mxu0 %v845
        %v847 = vand.u32 %v296, 4294901760
        %v848 = vsub.f32 %v296, %v847
        %849 = vmatpush.msra.mxu0 %v848
        %v850 = vand.u32 %v294, 4294901760
        %v851 = vsub.f32 %v294, %v850
        %852 = vmatpush.msra.mxu0 %v851
        %v853 = vand.u32 %v292, 4294901760
        %v854 = vsub.f32 %v292, %v853
        %855 = vmatpush.msra.mxu0 %v854
        %v856 = vand.u32 %v290, 4294901760
        %v857 = vsub.f32 %v290, %v856
        %858 = vmatpush.msra.mxu0 %v857
        %v859 = vand.u32 %v257, 4294901760
        %v860 = vsub.f32 %v257, %v859
        %861 = vmatmul.f32.gmra.mxu0 %v860
        %v862 = vpop.f32.mrf.mxu0
        %v863 = vadd.f32 %v809, %v862
        %864 = vdwg.mxu0
        %v865 = vand.u32 %v320, 4294901760
        %866 = vmatpush.msra.mxu0 %v865
        %v867 = vand.u32 %v318, 4294901760
        %868 = vmatpush.msra.mxu0 %v867
        %v869 = vand.u32 %v316, 4294901760
        %870 = vmatpush.msra.mxu0 %v869
        %v871 = vand.u32 %v314, 4294901760
        %872 = vmatpush.msra.mxu0 %v871
        %v873 = vand.u32 %v312, 4294901760
        %874 = vmatpush.msra.mxu0 %v873
        %v875 = vand.u32 %v310, 4294901760
        %876 = vmatpush.msra.mxu0 %v875
        %v877 = vand.u32 %v308, 4294901760
        %878 = vmatpush.msra.mxu0 %v877
        %v879 = vand.u32 %v306, 4294901760
        %880 = vmatpush.msra.mxu0 %v879
        %v881 = vand.u32 %v304, 4294901760
        %882 = vmatpush.msra.mxu0 %v881
        %v883 = vand.u32 %v302, 4294901760
        %884 = vmatpush.msra.mxu0 %v883
        %v885 = vand.u32 %v300, 4294901760
        %886 = vmatpush.msra.mxu0 %v885
        %v887 = vand.u32 %v298, 4294901760
        %888 = vmatpush.msra.mxu0 %v887
        %v889 = vand.u32 %v296, 4294901760
        %890 = vmatpush.msra.mxu0 %v889
        %v891 = vand.u32 %v294, 4294901760
        %892 = vmatpush.msra.mxu0 %v891
        %v893 = vand.u32 %v292, 4294901760
        %894 = vmatpush.msra.mxu0 %v893
        %v895 = vand.u32 %v290, 4294901760
        %896 = vmatpush.msra.mxu0 %v895
        %v897 = vand.u32 %v257, 4294901760
        %v898 = vsub.f32 %v257, %v897
        %v899 = vand.u32 %v898, 4294901760
        %900 = vmatmul.f32.gmra.mxu0 %v899
        %v901 = vpop.f32.mrf.mxu0
        %v902 = vadd.f32 %v863, %v901
        %903 = vdwg.mxu0
        %v904 = vand.u32 %v320, 4294901760
        %v905 = vsub.f32 %v320, %v904
        %v906 = vand.u32 %v905, 4294901760
        %907 = vmatpush.msra.mxu0 %v906
        %v908 = vand.u32 %v318, 4294901760
        %v909 = vsub.f32 %v318, %v908
        %v910 = vand.u32 %v909, 4294901760
        %911 = vmatpush.msra.mxu0 %v910
        %v912 = vand.u32 %v316, 4294901760
        %v913 = vsub.f32 %v316, %v912
        %v914 = vand.u32 %v913, 4294901760
        %915 = vmatpush.msra.mxu0 %v914
        %v916 = vand.u32 %v314, 4294901760
        %v917 = vsub.f32 %v314, %v916
        %v918 = vand.u32 %v917, 4294901760
        %919 = vmatpush.msra.mxu0 %v918
        %v920 = vand.u32 %v312, 4294901760
        %v921 = vsub.f32 %v312, %v920
        %v922 = vand.u32 %v921, 4294901760
        %923 = vmatpush.msra.mxu0 %v922
        %v924 = vand.u32 %v310, 4294901760
        %v925 = vsub.f32 %v310, %v924
        %v926 = vand.u32 %v925, 4294901760
        %927 = vmatpush.msra.mxu0 %v926
        %v928 = vand.u32 %v308, 4294901760
        %v929 = vsub.f32 %v308, %v928
        %v930 = vand.u32 %v929, 4294901760
        %931 = vmatpush.msra.mxu0 %v930
        %v932 = vand.u32 %v306, 4294901760
        %v933 = vsub.f32 %v306, %v932
        %v934 = vand.u32 %v933, 4294901760
        %935 = vmatpush.msra.mxu0 %v934
        %v936 = vand.u32 %v304, 4294901760
        %v937 = vsub.f32 %v304, %v936
        %v938 = vand.u32 %v937, 4294901760
        %939 = vmatpush.msra.mxu0 %v938
        %v940 = vand.u32 %v302, 4294901760
        %v941 = vsub.f32 %v302, %v940
        %v942 = vand.u32 %v941, 4294901760
        %943 = vmatpush.msra.mxu0 %v942
        %v944 = vand.u32 %v300, 4294901760
        %v945 = vsub.f32 %v300, %v944
        %v946 = vand.u32 %v945, 4294901760
        %947 = vmatpush.msra.mxu0 %v946
        %v948 = vand.u32 %v298, 4294901760
        %v949 = vsub.f32 %v298, %v948
        %v950 = vand.u32 %v949, 4294901760
        %951 = vmatpush.msra.mxu0 %v950
        %v952 = vand.u32 %v296, 4294901760
        %v953 = vsub.f32 %v296, %v952
        %v954 = vand.u32 %v953, 4294901760
        %955 = vmatpush.msra.mxu0 %v954
        %v956 = vand.u32 %v294, 4294901760
        %v957 = vsub.f32 %v294, %v956
        %v958 = vand.u32 %v957, 4294901760
        %959 = vmatpush.msra.mxu0 %v958
        %v960 = vand.u32 %v292, 4294901760
        %v961 = vsub.f32 %v292, %v960
        %v962 = vand.u32 %v961, 4294901760
        %963 = vmatpush.msra.mxu0 %v962
        %v964 = vand.u32 %v290, 4294901760
        %v965 = vsub.f32 %v290, %v964
        %v966 = vand.u32 %v965, 4294901760
        %967 = vmatpush.msra.mxu0 %v966
        %v968 = vand.u32 %v257, 4294901760
        %969 = vmatmul.f32.gmra.mxu0 %v968
        %v970 = vpop.f32.mrf.mxu0
        %v971 = vadd.f32 %v902, %v970
        %972 = vdwg.mxu0
        %v973 = vand.u32 %v320, 4294901760
        %974 = vmatpush.msra.mxu0 %v973
        %v975 = vand.u32 %v318, 4294901760
        %976 = vmatpush.msra.mxu0 %v975
        %v977 = vand.u32 %v316, 4294901760
        %978 = vmatpush.msra.mxu0 %v977
        %v979 = vand.u32 %v314, 4294901760
        %980 = vmatpush.msra.mxu0 %v979
        %v981 = vand.u32 %v312, 4294901760
        %982 = vmatpush.msra.mxu0 %v981
        %v983 = vand.u32 %v310, 4294901760
        %984 = vmatpush.msra.mxu0 %v983
        %v985 = vand.u32 %v308, 4294901760
        %986 = vmatpush.msra.mxu0 %v985
        %v987 = vand.u32 %v306, 4294901760
        %988 = vmatpush.msra.mxu0 %v987
        %v989 = vand.u32 %v304, 4294901760
        %990 = vmatpush.msra.mxu0 %v989
        %v991 = vand.u32 %v302, 4294901760
        %992 = vmatpush.msra.mxu0 %v991
        %v993 = vand.u32 %v300, 4294901760
        %994 = vmatpush.msra.mxu0 %v993
        %v995 = vand.u32 %v298, 4294901760
        %996 = vmatpush.msra.mxu0 %v995
        %v997 = vand.u32 %v296, 4294901760
        %998 = vmatpush.msra.mxu0 %v997
        %v999 = vand.u32 %v294, 4294901760
        %1000 = vmatpush.msra.mxu0 %v999
        %v1001 = vand.u32 %v292, 4294901760
        %1002 = vmatpush.msra.mxu0 %v1001
        %v1003 = vand.u32 %v290, 4294901760
        %1004 = vmatpush.msra.mxu0 %v1003
        %v1005 = vand.u32 %v257, 4294901760
        %1006 = vmatmul.f32.gmra.mxu0 %v1005
        %v1007 = vpop.f32.mrf.mxu0
        %v1008 = vadd.f32 %v971, %v1007
        %1009 = vdwg.mxu0
        %v1010 = vand.u32 %v289, 4294901760
        %1011 = vmatpush.msra.mxu0 %v1010
        %v1012 = vand.u32 %v287, 4294901760
        %1013 = vmatpush.msra.mxu0 %v1012
        %v1014 = vand.u32 %v285, 4294901760
        %1015 = vmatpush.msra.mxu0 %v1014
        %v1016 = vand.u32 %v283, 4294901760
        %1017 = vmatpush.msra.mxu0 %v1016
        %v1018 = vand.u32 %v281, 4294901760
        %1019 = vmatpush.msra.mxu0 %v1018
        %v1020 = vand.u32 %v279, 4294901760
        %1021 = vmatpush.msra.mxu0 %v1020
        %v1022 = vand.u32 %v277, 4294901760
        %1023 = vmatpush.msra.mxu0 %v1022
        %v1024 = vand.u32 %v275, 4294901760
        %1025 = vmatpush.msra.mxu0 %v1024
        %v1026 = vand.u32 %v273, 4294901760
        %1027 = vmatpush.msra.mxu0 %v1026
        %v1028 = vand.u32 %v271, 4294901760
        %1029 = vmatpush.msra.mxu0 %v1028
        %v1030 = vand.u32 %v269, 4294901760
        %1031 = vmatpush.msra.mxu0 %v1030
        %v1032 = vand.u32 %v267, 4294901760
        %1033 = vmatpush.msra.mxu0 %v1032
        %v1034 = vand.u32 %v265, 4294901760
        %1035 = vmatpush.msra.mxu0 %v1034
        %v1036 = vand.u32 %v263, 4294901760
        %1037 = vmatpush.msra.mxu0 %v1036
        %v1038 = vand.u32 %v261, 4294901760
        %1039 = vmatpush.msra.mxu0 %v1038
        %v1040 = vand.u32 %v259, 4294901760
        %1041 = vmatpush.msra.mxu0 %v1040
        %v1042 = vand.u32 %v256, 4294901760
        %v1043 = vsub.f32 %v256, %v1042
        %v1044 = vand.u32 %v1043, 4294901760
        %v1045 = vsub.f32 %v1043, %v1044
        %v1046 = vand.u32 %v1045, 4294901760
        %1047 = vmatmul.f32.gmra.mxu0 %v1046
        %v1048 = vpop.f32.mrf.mxu0
        %v1049 = vadd.f32 %v325, %v1048
        %1050 = vdwg.mxu0
        %v1051 = vand.u32 %v289, 4294901760
        %v1052 = vsub.f32 %v289, %v1051
        %v1053 = vand.u32 %v1052, 4294901760
        %v1054 = vsub.f32 %v1052, %v1053
        %v1055 = vand.u32 %v1054, 4294901760
        %1056 = vmatpush.msra.mxu0 %v1055
        %v1057 = vand.u32 %v287, 4294901760
        %v1058 = vsub.f32 %v287, %v1057
        %v1059 = vand.u32 %v1058, 4294901760
        %v1060 = vsub.f32 %v1058, %v1059
        %v1061 = vand.u32 %v1060, 4294901760
        %1062 = vmatpush.msra.mxu0 %v1061
        %v1063 = vand.u32 %v285, 4294901760
        %v1064 = vsub.f32 %v285, %v1063
        %v1065 = vand.u32 %v1064, 4294901760
        %v1066 = vsub.f32 %v1064, %v1065
        %v1067 = vand.u32 %v1066, 4294901760
        %1068 = vmatpush.msra.mxu0 %v1067
        %v1069 = vand.u32 %v283, 4294901760
        %v1070 = vsub.f32 %v283, %v1069
        %v1071 = vand.u32 %v1070, 4294901760
        %v1072 = vsub.f32 %v1070, %v1071
        %v1073 = vand.u32 %v1072, 4294901760
        %1074 = vmatpush.msra.mxu0 %v1073
        %v1075 = vand.u32 %v281, 4294901760
        %v1076 = vsub.f32 %v281, %v1075
        %v1077 = vand.u32 %v1076, 4294901760
        %v1078 = vsub.f32 %v1076, %v1077
        %v1079 = vand.u32 %v1078, 4294901760
        %1080 = vmatpush.msra.mxu0 %v1079
        %v1081 = vand.u32 %v279, 4294901760
        %v1082 = vsub.f32 %v279, %v1081
        %v1083 = vand.u32 %v1082, 4294901760
        %v1084 = vsub.f32 %v1082, %v1083
        %v1085 = vand.u32 %v1084, 4294901760
        %1086 = vmatpush.msra.mxu0 %v1085
        %v1087 = vand.u32 %v277, 4294901760
        %v1088 = vsub.f32 %v277, %v1087
        %v1089 = vand.u32 %v1088, 4294901760
        %v1090 = vsub.f32 %v1088, %v1089
        %v1091 = vand.u32 %v1090, 4294901760
        %1092 = vmatpush.msra.mxu0 %v1091
        %v1093 = vand.u32 %v275, 4294901760
        %v1094 = vsub.f32 %v275, %v1093
        %v1095 = vand.u32 %v1094, 4294901760
        %v1096 = vsub.f32 %v1094, %v1095
        %v1097 = vand.u32 %v1096, 4294901760
        %1098 = vmatpush.msra.mxu0 %v1097
        %v1099 = vand.u32 %v273, 4294901760
        %v1100 = vsub.f32 %v273, %v1099
        %v1101 = vand.u32 %v1100, 4294901760
        %v1102 = vsub.f32 %v1100, %v1101
        %v1103 = vand.u32 %v1102, 4294901760
        %1104 = vmatpush.msra.mxu0 %v1103
        %v1105 = vand.u32 %v271, 4294901760
        %v1106 = vsub.f32 %v271, %v1105
        %v1107 = vand.u32 %v1106, 4294901760
        %v1108 = vsub.f32 %v1106, %v1107
        %v1109 = vand.u32 %v1108, 4294901760
        %1110 = vmatpush.msra.mxu0 %v1109
        %v1111 = vand.u32 %v269, 4294901760
        %v1112 = vsub.f32 %v269, %v1111
        %v1113 = vand.u32 %v1112, 4294901760
        %v1114 = vsub.f32 %v1112, %v1113
        %v1115 = vand.u32 %v1114, 4294901760
        %1116 = vmatpush.msra.mxu0 %v1115
        %v1117 = vand.u32 %v267, 4294901760
        %v1118 = vsub.f32 %v267, %v1117
        %v1119 = vand.u32 %v1118, 4294901760
        %v1120 = vsub.f32 %v1118, %v1119
        %v1121 = vand.u32 %v1120, 4294901760
        %1122 = vmatpush.msra.mxu0 %v1121
        %v1123 = vand.u32 %v265, 4294901760
        %v1124 = vsub.f32 %v265, %v1123
        %v1125 = vand.u32 %v1124, 4294901760
        %v1126 = vsub.f32 %v1124, %v1125
        %v1127 = vand.u32 %v1126, 4294901760
        %1128 = vmatpush.msra.mxu0 %v1127
        %v1129 = vand.u32 %v263, 4294901760
        %v1130 = vsub.f32 %v263, %v1129
        %v1131 = vand.u32 %v1130, 4294901760
        %v1132 = vsub.f32 %v1130, %v1131
        %v1133 = vand.u32 %v1132, 4294901760
        %1134 = vmatpush.msra.mxu0 %v1133
        %v1135 = vand.u32 %v261, 4294901760
        %v1136 = vsub.f32 %v261, %v1135
        %v1137 = vand.u32 %v1136, 4294901760
        %v1138 = vsub.f32 %v1136, %v1137
        %v1139 = vand.u32 %v1138, 4294901760
        %1140 = vmatpush.msra.mxu0 %v1139
        %v1141 = vand.u32 %v259, 4294901760
        %v1142 = vsub.f32 %v259, %v1141
        %v1143 = vand.u32 %v1142, 4294901760
        %v1144 = vsub.f32 %v1142, %v1143
        %v1145 = vand.u32 %v1144, 4294901760
        %1146 = vmatpush.msra.mxu0 %v1145
        %v1147 = vand.u32 %v256, 4294901760
        %1148 = vmatmul.f32.gmra.mxu0 %v1147
        %v1149 = vpop.f32.mrf.mxu0
        %v1150 = vadd.f32 %v1049, %v1149
        %1151 = vdwg.mxu0
        %v1152 = vand.u32 %v289, 4294901760
        %v1153 = vsub.f32 %v289, %v1152
        %1154 = vmatpush.msra.mxu0 %v1153
        %v1155 = vand.u32 %v287, 4294901760
        %v1156 = vsub.f32 %v287, %v1155
        %1157 = vmatpush.msra.mxu0 %v1156
        %v1158 = vand.u32 %v285, 4294901760
        %v1159 = vsub.f32 %v285, %v1158
        %1160 = vmatpush.msra.mxu0 %v1159
        %v1161 = vand.u32 %v283, 4294901760
        %v1162 = vsub.f32 %v283, %v1161
        %1163 = vmatpush.msra.mxu0 %v1162
        %v1164 = vand.u32 %v281, 4294901760
        %v1165 = vsub.f32 %v281, %v1164
        %1166 = vmatpush.msra.mxu0 %v1165
        %v1167 = vand.u32 %v279, 4294901760
        %v1168 = vsub.f32 %v279, %v1167
        %1169 = vmatpush.msra.mxu0 %v1168
        %v1170 = vand.u32 %v277, 4294901760
        %v1171 = vsub.f32 %v277, %v1170
        %1172 = vmatpush.msra.mxu0 %v1171
        %v1173 = vand.u32 %v275, 4294901760
        %v1174 = vsub.f32 %v275, %v1173
        %1175 = vmatpush.msra.mxu0 %v1174
        %v1176 = vand.u32 %v273, 4294901760
        %v1177 = vsub.f32 %v273, %v1176
        %1178 = vmatpush.msra.mxu0 %v1177
        %v1179 = vand.u32 %v271, 4294901760
        %v1180 = vsub.f32 %v271, %v1179
        %1181 = vmatpush.msra.mxu0 %v1180
        %v1182 = vand.u32 %v269, 4294901760
        %v1183 = vsub.f32 %v269, %v1182
        %1184 = vmatpush.msra.mxu0 %v1183
        %v1185 = vand.u32 %v267, 4294901760
        %v1186 = vsub.f32 %v267, %v1185
        %1187 = vmatpush.msra.mxu0 %v1186
        %v1188 = vand.u32 %v265, 4294901760
        %v1189 = vsub.f32 %v265, %v1188
        %1190 = vmatpush.msra.mxu0 %v1189
        %v1191 = vand.u32 %v263, 4294901760
        %v1192 = vsub.f32 %v263, %v1191
        %1193 = vmatpush.msra.mxu0 %v1192
        %v1194 = vand.u32 %v261, 4294901760
        %v1195 = vsub.f32 %v261, %v1194
        %1196 = vmatpush.msra.mxu0 %v1195
        %v1197 = vand.u32 %v259, 4294901760
        %v1198 = vsub.f32 %v259, %v1197
        %1199 = vmatpush.msra.mxu0 %v1198
        %v1200 = vand.u32 %v256, 4294901760
        %v1201 = vsub.f32 %v256, %v1200
        %1202 = vmatmul.f32.gmra.mxu0 %v1201
        %v1203 = vpop.f32.mrf.mxu0
        %v1204 = vadd.f32 %v1150, %v1203
        %1205 = vdwg.mxu0
        %v1206 = vand.u32 %v289, 4294901760
        %1207 = vmatpush.msra.mxu0 %v1206
        %v1208 = vand.u32 %v287, 4294901760
        %1209 = vmatpush.msra.mxu0 %v1208
        %v1210 = vand.u32 %v285, 4294901760
        %1211 = vmatpush.msra.mxu0 %v1210
        %v1212 = vand.u32 %v283, 4294901760
        %1213 = vmatpush.msra.mxu0 %v1212
        %v1214 = vand.u32 %v281, 4294901760
        %1215 = vmatpush.msra.mxu0 %v1214
        %v1216 = vand.u32 %v279, 4294901760
        %1217 = vmatpush.msra.mxu0 %v1216
        %v1218 = vand.u32 %v277, 4294901760
        %1219 = vmatpush.msra.mxu0 %v1218
        %v1220 = vand.u32 %v275, 4294901760
        %1221 = vmatpush.msra.mxu0 %v1220
        %v1222 = vand.u32 %v273, 4294901760
        %1223 = vmatpush.msra.mxu0 %v1222
        %v1224 = vand.u32 %v271, 4294901760
        %1225 = vmatpush.msra.mxu0 %v1224
        %v1226 = vand.u32 %v269, 4294901760
        %1227 = vmatpush.msra.mxu0 %v1226
        %v1228 = vand.u32 %v267, 4294901760
        %1229 = vmatpush.msra.mxu0 %v1228
        %v1230 = vand.u32 %v265, 4294901760
        %1231 = vmatpush.msra.mxu0 %v1230
        %v1232 = vand.u32 %v263, 4294901760
        %1233 = vmatpush.msra.mxu0 %v1232
        %v1234 = vand.u32 %v261, 4294901760
        %1235 = vmatpush.msra.mxu0 %v1234
        %v1236 = vand.u32 %v259, 4294901760
        %1237 = vmatpush.msra.mxu0 %v1236
        %v1238 = vand.u32 %v256, 4294901760
        %v1239 = vsub.f32 %v256, %v1238
        %v1240 = vand.u32 %v1239, 4294901760
        %1241 = vmatmul.f32.gmra.mxu0 %v1240
        %v1242 = vpop.f32.mrf.mxu0
        %v1243 = vadd.f32 %v1204, %v1242
        %1244 = vdwg.mxu0
        %v1245 = vand.u32 %v289, 4294901760
        %v1246 = vsub.f32 %v289, %v1245
        %v1247 = vand.u32 %v1246, 4294901760
        %1248 = vmatpush.msra.mxu0 %v1247
        %v1249 = vand.u32 %v287, 4294901760
        %v1250 = vsub.f32 %v287, %v1249
        %v1251 = vand.u32 %v1250, 4294901760
        %1252 = vmatpush.msra.mxu0 %v1251
        %v1253 = vand.u32 %v285, 4294901760
        %v1254 = vsub.f32 %v285, %v1253
        %v1255 = vand.u32 %v1254, 4294901760
        %1256 = vmatpush.msra.mxu0 %v1255
        %v1257 = vand.u32 %v283, 4294901760
        %v1258 = vsub.f32 %v283, %v1257
        %v1259 = vand.u32 %v1258, 4294901760
        %1260 = vmatpush.msra.mxu0 %v1259
        %v1261 = vand.u32 %v281, 4294901760
        %v1262 = vsub.f32 %v281, %v1261
        %v1263 = vand.u32 %v1262, 4294901760
        %1264 = vmatpush.msra.mxu0 %v1263
        %v1265 = vand.u32 %v279, 4294901760
        %v1266 = vsub.f32 %v279, %v1265
        %v1267 = vand.u32 %v1266, 4294901760
        %1268 = vmatpush.msra.mxu0 %v1267
        %v1269 = vand.u32 %v277, 4294901760
        %v1270 = vsub.f32 %v277, %v1269
        %v1271 = vand.u32 %v1270, 4294901760
        %1272 = vmatpush.msra.mxu0 %v1271
        %v1273 = vand.u32 %v275, 4294901760
        %v1274 = vsub.f32 %v275, %v1273
        %v1275 = vand.u32 %v1274, 4294901760
        %1276 = vmatpush.msra.mxu0 %v1275
        %v1277 = vand.u32 %v273, 4294901760
        %v1278 = vsub.f32 %v273, %v1277
        %v1279 = vand.u32 %v1278, 4294901760
        %1280 = vmatpush.msra.mxu0 %v1279
        %v1281 = vand.u32 %v271, 4294901760
        %v1282 = vsub.f32 %v271, %v1281
        %v1283 = vand.u32 %v1282, 4294901760
        %1284 = vmatpush.msra.mxu0 %v1283
        %v1285 = vand.u32 %v269, 4294901760
        %v1286 = vsub.f32 %v269, %v1285
        %v1287 = vand.u32 %v1286, 4294901760
        %1288 = vmatpush.msra.mxu0 %v1287
        %v1289 = vand.u32 %v267, 4294901760
        %v1290 = vsub.f32 %v267, %v1289
        %v1291 = vand.u32 %v1290, 4294901760
        %1292 = vmatpush.msra.mxu0 %v1291
        %v1293 = vand.u32 %v265, 4294901760
        %v1294 = vsub.f32 %v265, %v1293
        %v1295 = vand.u32 %v1294, 4294901760
        %1296 = vmatpush.msra.mxu0 %v1295
        %v1297 = vand.u32 %v263, 4294901760
        %v1298 = vsub.f32 %v263, %v1297
        %v1299 = vand.u32 %v1298, 4294901760
        %1300 = vmatpush.msra.mxu0 %v1299
        %v1301 = vand.u32 %v261, 4294901760
        %v1302 = vsub.f32 %v261, %v1301
        %v1303 = vand.u32 %v1302, 4294901760
        %1304 = vmatpush.msra.mxu0 %v1303
        %v1305 = vand.u32 %v259, 4294901760
        %v1306 = vsub.f32 %v259, %v1305
        %v1307 = vand.u32 %v1306, 4294901760
        %1308 = vmatpush.msra.mxu0 %v1307
        %v1309 = vand.u32 %v256, 4294901760
        %1310 = vmatmul.f32.gmra.mxu0 %v1309
        %v1311 = vpop.f32.mrf.mxu0
        %v1312 = vadd.f32 %v1243, %v1311
        %1313 = vdwg.mxu0
        %v1314 = vand.u32 %v289, 4294901760
        %1315 = vmatpush.msra.mxu0 %v1314
        %v1316 = vand.u32 %v287, 4294901760
        %1317 = vmatpush.msra.mxu0 %v1316
        %v1318 = vand.u32 %v285, 4294901760
        %1319 = vmatpush.msra.mxu0 %v1318
        %v1320 = vand.u32 %v283, 4294901760
        %1321 = vmatpush.msra.mxu0 %v1320
        %v1322 = vand.u32 %v281, 4294901760
        %1323 = vmatpush.msra.mxu0 %v1322
        %v1324 = vand.u32 %v279, 4294901760
        %1325 = vmatpush.msra.mxu0 %v1324
        %v1326 = vand.u32 %v277, 4294901760
        %1327 = vmatpush.msra.mxu0 %v1326
        %v1328 = vand.u32 %v275, 4294901760
        %1329 = vmatpush.msra.mxu0 %v1328
        %v1330 = vand.u32 %v273, 4294901760
        %1331 = vmatpush.msra.mxu0 %v1330
        %v1332 = vand.u32 %v271, 4294901760
        %1333 = vmatpush.msra.mxu0 %v1332
        %v1334 = vand.u32 %v269, 4294901760
        %1335 = vmatpush.msra.mxu0 %v1334
        %v1336 = vand.u32 %v267, 4294901760
        %1337 = vmatpush.msra.mxu0 %v1336
        %v1338 = vand.u32 %v265, 4294901760
        %1339 = vmatpush.msra.mxu0 %v1338
        %v1340 = vand.u32 %v263, 4294901760
        %1341 = vmatpush.msra.mxu0 %v1340
        %v1342 = vand.u32 %v261, 4294901760
        %1343 = vmatpush.msra.mxu0 %v1342
        %v1344 = vand.u32 %v259, 4294901760
        %1345 = vmatpush.msra.mxu0 %v1344
        %v1346 = vand.u32 %v256, 4294901760
        %1347 = vmatmul.f32.gmra.mxu0 %v1346
        %v1348 = vpop.f32.mrf.mxu0
        %v1349 = vadd.f32 %v1312, %v1348
        %1350 = vdwg.mxu0
        %v1351 = vand.u32 %v321, 4294901760
        %1352 = vmatpush.msra.mxu0 %v1351
        %v1353 = vand.u32 %v319, 4294901760
        %1354 = vmatpush.msra.mxu0 %v1353
        %v1355 = vand.u32 %v317, 4294901760
        %1356 = vmatpush.msra.mxu0 %v1355
        %v1357 = vand.u32 %v315, 4294901760
        %1358 = vmatpush.msra.mxu0 %v1357
        %v1359 = vand.u32 %v313, 4294901760
        %1360 = vmatpush.msra.mxu0 %v1359
        %v1361 = vand.u32 %v311, 4294901760
        %1362 = vmatpush.msra.mxu0 %v1361
        %v1363 = vand.u32 %v309, 4294901760
        %1364 = vmatpush.msra.mxu0 %v1363
        %v1365 = vand.u32 %v307, 4294901760
        %1366 = vmatpush.msra.mxu0 %v1365
        %v1367 = vand.u32 %v305, 4294901760
        %1368 = vmatpush.msra.mxu0 %v1367
        %v1369 = vand.u32 %v303, 4294901760
        %1370 = vmatpush.msra.mxu0 %v1369
        %v1371 = vand.u32 %v301, 4294901760
        %1372 = vmatpush.msra.mxu0 %v1371
        %v1373 = vand.u32 %v299, 4294901760
        %1374 = vmatpush.msra.mxu0 %v1373
        %v1375 = vand.u32 %v297, 4294901760
        %1376 = vmatpush.msra.mxu0 %v1375
        %v1377 = vand.u32 %v295, 4294901760
        %1378 = vmatpush.msra.mxu0 %v1377
        %v1379 = vand.u32 %v293, 4294901760
        %1380 = vmatpush.msra.mxu0 %v1379
        %v1381 = vand.u32 %v291, 4294901760
        %1382 = vmatpush.msra.mxu0 %v1381
        %v1383 = vand.u32 %v257, 4294901760
        %v1384 = vsub.f32 %v257, %v1383
        %v1385 = vand.u32 %v1384, 4294901760
        %v1386 = vsub.f32 %v1384, %v1385
        %v1387 = vand.u32 %v1386, 4294901760
        %1388 = vmatmul.f32.gmra.mxu0 %v1387
        %v1389 = vpop.f32.mrf.mxu0
        %v1390 = vadd.f32 %v1349, %v1389
        %1391 = vdwg.mxu0
        %v1392 = vand.u32 %v321, 4294901760
        %v1393 = vsub.f32 %v321, %v1392
        %v1394 = vand.u32 %v1393, 4294901760
        %v1395 = vsub.f32 %v1393, %v1394
        %v1396 = vand.u32 %v1395, 4294901760
        %1397 = vmatpush.msra.mxu0 %v1396
        %v1398 = vand.u32 %v319, 4294901760
        %v1399 = vsub.f32 %v319, %v1398
        %v1400 = vand.u32 %v1399, 4294901760
        %v1401 = vsub.f32 %v1399, %v1400
        %v1402 = vand.u32 %v1401, 4294901760
        %1403 = vmatpush.msra.mxu0 %v1402
        %v1404 = vand.u32 %v317, 4294901760
        %v1405 = vsub.f32 %v317, %v1404
        %v1406 = vand.u32 %v1405, 4294901760
        %v1407 = vsub.f32 %v1405, %v1406
        %v1408 = vand.u32 %v1407, 4294901760
        %1409 = vmatpush.msra.mxu0 %v1408
        %v1410 = vand.u32 %v315, 4294901760
        %v1411 = vsub.f32 %v315, %v1410
        %v1412 = vand.u32 %v1411, 4294901760
        %v1413 = vsub.f32 %v1411, %v1412
        %v1414 = vand.u32 %v1413, 4294901760
        %1415 = vmatpush.msra.mxu0 %v1414
        %v1416 = vand.u32 %v313, 4294901760
        %v1417 = vsub.f32 %v313, %v1416
        %v1418 = vand.u32 %v1417, 4294901760
        %v1419 = vsub.f32 %v1417, %v1418
        %v1420 = vand.u32 %v1419, 4294901760
        %1421 = vmatpush.msra.mxu0 %v1420
        %v1422 = vand.u32 %v311, 4294901760
        %v1423 = vsub.f32 %v311, %v1422
        %v1424 = vand.u32 %v1423, 4294901760
        %v1425 = vsub.f32 %v1423, %v1424
        %v1426 = vand.u32 %v1425, 4294901760
        %1427 = vmatpush.msra.mxu0 %v1426
        %v1428 = vand.u32 %v309, 4294901760
        %v1429 = vsub.f32 %v309, %v1428
        %v1430 = vand.u32 %v1429, 4294901760
        %v1431 = vsub.f32 %v1429, %v1430
        %v1432 = vand.u32 %v1431, 4294901760
        %1433 = vmatpush.msra.mxu0 %v1432
        %v1434 = vand.u32 %v307, 4294901760
        %v1435 = vsub.f32 %v307, %v1434
        %v1436 = vand.u32 %v1435, 4294901760
        %v1437 = vsub.f32 %v1435, %v1436
        %v1438 = vand.u32 %v1437, 4294901760
        %1439 = vmatpush.msra.mxu0 %v1438
        %v1440 = vand.u32 %v305, 4294901760
        %v1441 = vsub.f32 %v305, %v1440
        %v1442 = vand.u32 %v1441, 4294901760
        %v1443 = vsub.f32 %v1441, %v1442
        %v1444 = vand.u32 %v1443, 4294901760
        %1445 = vmatpush.msra.mxu0 %v1444
        %v1446 = vand.u32 %v303, 4294901760
        %v1447 = vsub.f32 %v303, %v1446
        %v1448 = vand.u32 %v1447, 4294901760
        %v1449 = vsub.f32 %v1447, %v1448
        %v1450 = vand.u32 %v1449, 4294901760
        %1451 = vmatpush.msra.mxu0 %v1450
        %v1452 = vand.u32 %v301, 4294901760
        %v1453 = vsub.f32 %v301, %v1452
        %v1454 = vand.u32 %v1453, 4294901760
        %v1455 = vsub.f32 %v1453, %v1454
        %v1456 = vand.u32 %v1455, 4294901760
        %1457 = vmatpush.msra.mxu0 %v1456
        %v1458 = vand.u32 %v299, 4294901760
        %v1459 = vsub.f32 %v299, %v1458
        %v1460 = vand.u32 %v1459, 4294901760
        %v1461 = vsub.f32 %v1459, %v1460
        %v1462 = vand.u32 %v1461, 4294901760
        %1463 = vmatpush.msra.mxu0 %v1462
        %v1464 = vand.u32 %v297, 4294901760
        %v1465 = vsub.f32 %v297, %v1464
        %v1466 = vand.u32 %v1465, 4294901760
        %v1467 = vsub.f32 %v1465, %v1466
        %v1468 = vand.u32 %v1467, 4294901760
        %1469 = vmatpush.msra.mxu0 %v1468
        %v1470 = vand.u32 %v295, 4294901760
        %v1471 = vsub.f32 %v295, %v1470
        %v1472 = vand.u32 %v1471, 4294901760
        %v1473 = vsub.f32 %v1471, %v1472
        %v1474 = vand.u32 %v1473, 4294901760
        %1475 = vmatpush.msra.mxu0 %v1474
        %v1476 = vand.u32 %v293, 4294901760
        %v1477 = vsub.f32 %v293, %v1476
        %v1478 = vand.u32 %v1477, 4294901760
        %v1479 = vsub.f32 %v1477, %v1478
        %v1480 = vand.u32 %v1479, 4294901760
        %1481 = vmatpush.msra.mxu0 %v1480
        %v1482 = vand.u32 %v291, 4294901760
        %v1483 = vsub.f32 %v291, %v1482
        %v1484 = vand.u32 %v1483, 4294901760
        %v1485 = vsub.f32 %v1483, %v1484
        %v1486 = vand.u32 %v1485, 4294901760
        %1487 = vmatpush.msra.mxu0 %v1486
        %v1488 = vand.u32 %v257, 4294901760
        %1489 = vmatmul.f32.gmra.mxu0 %v1488
        %v1490 = vpop.f32.mrf.mxu0
        %v1491 = vadd.f32 %v1390, %v1490
        %1492 = vdwg.mxu0
        %v1493 = vand.u32 %v321, 4294901760
        %v1494 = vsub.f32 %v321, %v1493
        %1495 = vmatpush.msra.mxu0 %v1494
        %v1496 = vand.u32 %v319, 4294901760
        %v1497 = vsub.f32 %v319, %v1496
        %1498 = vmatpush.msra.mxu0 %v1497
        %v1499 = vand.u32 %v317, 4294901760
        %v1500 = vsub.f32 %v317, %v1499
        %1501 = vmatpush.msra.mxu0 %v1500
        %v1502 = vand.u32 %v315, 4294901760
        %v1503 = vsub.f32 %v315, %v1502
        %1504 = vmatpush.msra.mxu0 %v1503
        %v1505 = vand.u32 %v313, 4294901760
        %v1506 = vsub.f32 %v313, %v1505
        %1507 = vmatpush.msra.mxu0 %v1506
        %v1508 = vand.u32 %v311, 4294901760
        %v1509 = vsub.f32 %v311, %v1508
        %1510 = vmatpush.msra.mxu0 %v1509
        %v1511 = vand.u32 %v309, 4294901760
        %v1512 = vsub.f32 %v309, %v1511
        %1513 = vmatpush.msra.mxu0 %v1512
        %v1514 = vand.u32 %v307, 4294901760
        %v1515 = vsub.f32 %v307, %v1514
        %1516 = vmatpush.msra.mxu0 %v1515
        %v1517 = vand.u32 %v305, 4294901760
        %v1518 = vsub.f32 %v305, %v1517
        %1519 = vmatpush.msra.mxu0 %v1518
        %v1520 = vand.u32 %v303, 4294901760
        %v1521 = vsub.f32 %v303, %v1520
        %1522 = vmatpush.msra.mxu0 %v1521
        %v1523 = vand.u32 %v301, 4294901760
        %v1524 = vsub.f32 %v301, %v1523
        %1525 = vmatpush.msra.mxu0 %v1524
        %v1526 = vand.u32 %v299, 4294901760
        %v1527 = vsub.f32 %v299, %v1526
        %1528 = vmatpush.msra.mxu0 %v1527
        %v1529 = vand.u32 %v297, 4294901760
        %v1530 = vsub.f32 %v297, %v1529
        %1531 = vmatpush.msra.mxu0 %v1530
        %v1532 = vand.u32 %v295, 4294901760
        %v1533 = vsub.f32 %v295, %v1532
        %1534 = vmatpush.msra.mxu0 %v1533
        %v1535 = vand.u32 %v293, 4294901760
        %v1536 = vsub.f32 %v293, %v1535
        %1537 = vmatpush.msra.mxu0 %v1536
        %v1538 = vand.u32 %v291, 4294901760
        %v1539 = vsub.f32 %v291, %v1538
        %1540 = vmatpush.msra.mxu0 %v1539
        %v1541 = vand.u32 %v257, 4294901760
        %v1542 = vsub.f32 %v257, %v1541
        %1543 = vmatmul.f32.gmra.mxu0 %v1542
        %v1544 = vpop.f32.mrf.mxu0
        %v1545 = vadd.f32 %v1491, %v1544
        %1546 = vdwg.mxu0
        %v1547 = vand.u32 %v321, 4294901760
        %1548 = vmatpush.msra.mxu0 %v1547
        %v1549 = vand.u32 %v319, 4294901760
        %1550 = vmatpush.msra.mxu0 %v1549
        %v1551 = vand.u32 %v317, 4294901760
        %1552 = vmatpush.msra.mxu0 %v1551
        %v1553 = vand.u32 %v315, 4294901760
        %1554 = vmatpush.msra.mxu0 %v1553
        %v1555 = vand.u32 %v313, 4294901760
        %1556 = vmatpush.msra.mxu0 %v1555
        %v1557 = vand.u32 %v311, 4294901760
        %1558 = vmatpush.msra.mxu0 %v1557
        %v1559 = vand.u32 %v309, 4294901760
        %1560 = vmatpush.msra.mxu0 %v1559
        %v1561 = vand.u32 %v307, 4294901760
        %1562 = vmatpush.msra.mxu0 %v1561
        %v1563 = vand.u32 %v305, 4294901760
        %1564 = vmatpush.msra.mxu0 %v1563
        %v1565 = vand.u32 %v303, 4294901760
        %1566 = vmatpush.msra.mxu0 %v1565
        %v1567 = vand.u32 %v301, 4294901760
        %1568 = vmatpush.msra.mxu0 %v1567
        %v1569 = vand.u32 %v299, 4294901760
        %1570 = vmatpush.msra.mxu0 %v1569
        %v1571 = vand.u32 %v297, 4294901760
        %1572 = vmatpush.msra.mxu0 %v1571
        %v1573 = vand.u32 %v295, 4294901760
        %1574 = vmatpush.msra.mxu0 %v1573
        %v1575 = vand.u32 %v293, 4294901760
        %1576 = vmatpush.msra.mxu0 %v1575
        %v1577 = vand.u32 %v291, 4294901760
        %1578 = vmatpush.msra.mxu0 %v1577
        %v1579 = vand.u32 %v257, 4294901760
        %v1580 = vsub.f32 %v257, %v1579
        %v1581 = vand.u32 %v1580, 4294901760
        %1582 = vmatmul.f32.gmra.mxu0 %v1581
        %v1583 = vpop.f32.mrf.mxu0
        %v1584 = vadd.f32 %v1545, %v1583
        %1585 = vdwg.mxu0
        %v1586 = vand.u32 %v321, 4294901760
        %v1587 = vsub.f32 %v321, %v1586
        %v1588 = vand.u32 %v1587, 4294901760
        %1589 = vmatpush.msra.mxu0 %v1588
        %v1590 = vand.u32 %v319, 4294901760
        %v1591 = vsub.f32 %v319, %v1590
        %v1592 = vand.u32 %v1591, 4294901760
        %1593 = vmatpush.msra.mxu0 %v1592
        %v1594 = vand.u32 %v317, 4294901760
        %v1595 = vsub.f32 %v317, %v1594
        %v1596 = vand.u32 %v1595, 4294901760
        %1597 = vmatpush.msra.mxu0 %v1596
        %v1598 = vand.u32 %v315, 4294901760
        %v1599 = vsub.f32 %v315, %v1598
        %v1600 = vand.u32 %v1599, 4294901760
        %1601 = vmatpush.msra.mxu0 %v1600
        %v1602 = vand.u32 %v313, 4294901760
        %v1603 = vsub.f32 %v313, %v1602
        %v1604 = vand.u32 %v1603, 4294901760
        %1605 = vmatpush.msra.mxu0 %v1604
        %v1606 = vand.u32 %v311, 4294901760
        %v1607 = vsub.f32 %v311, %v1606
        %v1608 = vand.u32 %v1607, 4294901760
        %1609 = vmatpush.msra.mxu0 %v1608
        %v1610 = vand.u32 %v309, 4294901760
        %v1611 = vsub.f32 %v309, %v1610
        %v1612 = vand.u32 %v1611, 4294901760
        %1613 = vmatpush.msra.mxu0 %v1612
        %v1614 = vand.u32 %v307, 4294901760
        %v1615 = vsub.f32 %v307, %v1614
        %v1616 = vand.u32 %v1615, 4294901760
        %1617 = vmatpush.msra.mxu0 %v1616
        %v1618 = vand.u32 %v305, 4294901760
        %v1619 = vsub.f32 %v305, %v1618
        %v1620 = vand.u32 %v1619, 4294901760
        %1621 = vmatpush.msra.mxu0 %v1620
        %v1622 = vand.u32 %v303, 4294901760
        %v1623 = vsub.f32 %v303, %v1622
        %v1624 = vand.u32 %v1623, 4294901760
        %1625 = vmatpush.msra.mxu0 %v1624
        %v1626 = vand.u32 %v301, 4294901760
        %v1627 = vsub.f32 %v301, %v1626
        %v1628 = vand.u32 %v1627, 4294901760
        %1629 = vmatpush.msra.mxu0 %v1628
        %v1630 = vand.u32 %v299, 4294901760
        %v1631 = vsub.f32 %v299, %v1630
        %v1632 = vand.u32 %v1631, 4294901760
        %1633 = vmatpush.msra.mxu0 %v1632
        %v1634 = vand.u32 %v297, 4294901760
        %v1635 = vsub.f32 %v297, %v1634
        %v1636 = vand.u32 %v1635, 4294901760
        %1637 = vmatpush.msra.mxu0 %v1636
        %v1638 = vand.u32 %v295, 4294901760
        %v1639 = vsub.f32 %v295, %v1638
        %v1640 = vand.u32 %v1639, 4294901760
        %1641 = vmatpush.msra.mxu0 %v1640
        %v1642 = vand.u32 %v293, 4294901760
        %v1643 = vsub.f32 %v293, %v1642
        %v1644 = vand.u32 %v1643, 4294901760
        %1645 = vmatpush.msra.mxu0 %v1644
        %v1646 = vand.u32 %v291, 4294901760
        %v1647 = vsub.f32 %v291, %v1646
        %v1648 = vand.u32 %v1647, 4294901760
        %1649 = vmatpush.msra.mxu0 %v1648
        %v1650 = vand.u32 %v257, 4294901760
        %1651 = vmatmul.f32.gmra.mxu0 %v1650
        %v1652 = vpop.f32.mrf.mxu0
        %v1653 = vadd.f32 %v1584, %v1652
        %1654 = vdwg.mxu0
        %v1655 = vand.u32 %v321, 4294901760
        %1656 = vmatpush.msra.mxu0 %v1655
        %v1657 = vand.u32 %v319, 4294901760
        %1658 = vmatpush.msra.mxu0 %v1657
        %v1659 = vand.u32 %v317, 4294901760
        %1660 = vmatpush.msra.mxu0 %v1659
        %v1661 = vand.u32 %v315, 4294901760
        %1662 = vmatpush.msra.mxu0 %v1661
        %v1663 = vand.u32 %v313, 4294901760
        %1664 = vmatpush.msra.mxu0 %v1663
        %v1665 = vand.u32 %v311, 4294901760
        %1666 = vmatpush.msra.mxu0 %v1665
        %v1667 = vand.u32 %v309, 4294901760
        %1668 = vmatpush.msra.mxu0 %v1667
        %v1669 = vand.u32 %v307, 4294901760
        %1670 = vmatpush.msra.mxu0 %v1669
        %v1671 = vand.u32 %v305, 4294901760
        %1672 = vmatpush.msra.mxu0 %v1671
        %v1673 = vand.u32 %v303, 4294901760
        %1674 = vmatpush.msra.mxu0 %v1673
        %v1675 = vand.u32 %v301, 4294901760
        %1676 = vmatpush.msra.mxu0 %v1675
        %v1677 = vand.u32 %v299, 4294901760
        %1678 = vmatpush.msra.mxu0 %v1677
        %v1679 = vand.u32 %v297, 4294901760
        %1680 = vmatpush.msra.mxu0 %v1679
        %v1681 = vand.u32 %v295, 4294901760
        %1682 = vmatpush.msra.mxu0 %v1681
        %v1683 = vand.u32 %v293, 4294901760
        %1684 = vmatpush.msra.mxu0 %v1683
        %v1685 = vand.u32 %v291, 4294901760
        %1686 = vmatpush.msra.mxu0 %v1685
        %v1687 = vand.u32 %v257, 4294901760
        %1688 = vmatmul.f32.gmra.mxu0 %v1687
        %v1689 = vpop.f32.mrf.mxu0
        %v1690 = vadd.f32 %v1653, %v1689
        %1691 = vdwg.mxu0
        %1692 = vmax.xlane.f32.xlu0 %v1690
        %v1693 = vpop.xlane.xlu0 %1692
        %v1694 = vsub.f32 %v1690, %v1693
        %v1695 = vmul.f32 %v1694, 1.442695
        %v1696 = vpow.pop %v1695
        %1697 = vadd.xlane.f32.xlu0 %v1696
        %v1698 = vpop.xlane.xlu0 %1697
        %v1699 = vlog2.pop %v1698
        %v1700 = vmul.f32 %v1699, 0.6931472
        %1701 = vst [vmem:[#allocation2 + $0x8] sm:$0xff] %v1008
        %1702 = vst [vmem:[%s233] sm:$0xff] %v1008
        %v1703 = vsub.f32 %v1694, %v1700
        %1704 = vst [vmem:[%s247] sm:$0xff] %v1703
        %s1705 = sand.u32 %s118, 1
        %s1706 = scalar_lea.sflag [#allocation5], %s1705
        %s1707 = sand.u32 %s118, 1
        %s1708 = smul.addr %s1707, 8
        %s1709 = scalar_lea.vmem [#allocation6], %s1708
        %p1710 = scmp.lt.s32.totalorder %s21, 15
        %s1711 = scalar_select %p1710, %s21, 15
        %s1712 = smul.addr %s1711, 8
        %s1713 = scalar_lea.vmem %s5, %s1712
        // Predicated region
        $region45: #{_lambda_.1} parent=35 // pred_check
          %p1714 = pneg %p128
        $region46: #{_lambda_.1} parent=35 // pred_check_branch
          %1716 = sbr.rel (%p1714) target = $region48
        $region47: #{_lambda_.1} parent=35 // pred_region
          %1718 = vsyncadd %s1706, 0
          %s1719 = smul.addr %s21, 8
          %s1720 = scalar_lea.hbm %s4, %s1719
          %s1722 = sshll.u32 %s1709, 4
          %s1723 = int_to_ptr.vmem [resolvable:$true] %s1722
          %s1724 = sshll.u32 %s1720, 4
          %s1725 = int_to_ptr.hbm [resolvable:$true] %s1724
          %1727 = dma.vmem_to_hbm [thread:$0]  %s1723, 128, %s1725, %s1706
        $region48: #{_lambda_.1} parent=35 // pred_fallthru
          _
        // Predicated region
        $region49: #{_lambda_.1} parent=35 // pred_check
          %p1728 = pneg %p154
        $region50: #{_lambda_.1} parent=35 // pred_check_branch
          %1730 = sbr.rel (%p1728) target = $region52
        $region51: #{_lambda_.1} parent=35 // pred_region
          _
        $region52: #{_lambda_.1} parent=35 // pred_fallthru
          _
      $region36: #{_lambda_.1} parent=5 // pred_fallthru
        _
      %p1731 = scmp.le.s32.totalorder 2, %s16
      // Predicated region
      $region53: #{_lambda_.1} parent=5 // pred_check
        %p1732 = pneg %p1731
      $region54: #{_lambda_.1} parent=5 // pred_check_branch
        %1734 = sbr.rel (%p1732) target = $region56
      $region55: #{_lambda_.1} parent=5 // pred_region
        %s1735 = ssub.s32 %s16, 2
        // Predicated region
        $region57: #{_lambda_.1} parent=55 // pred_check
          %p1736 = pneg %p134
        $region58: #{_lambda_.1} parent=55 // pred_check_branch
          %1738 = sbr.rel (%p1736) target = $region60
        $region59: #{_lambda_.1} parent=55 // pred_region
          %s1739 = sand.u32 %s119, 1
          %s1740 = scalar_lea.sflag [#allocation5], %s1739
          %s1741 = sand.u32 %s119, 1
          %s1742 = smul.addr %s1741, 8
          %s1743 = scalar_lea.vmem [#allocation6], %s1742
          %1745 = dma.done %s1740, 128
        $region60: #{_lambda_.1} parent=55 // pred_fallthru
          _
        // Predicated region
        $region61: #{_lambda_.1} parent=55 // pred_check
          %p1746 = pneg %p160
        $region62: #{_lambda_.1} parent=55 // pred_check_branch
          %1748 = sbr.rel (%p1746) target = $region64
        $region63: #{_lambda_.1} parent=55 // pred_region
          %p1749 = scmp.lt.s32.totalorder %s22, 15
          %s1750 = scalar_select %p1749, %s22, 15
          %s1751 = smul.addr %s1750, 8
          %s1752 = scalar_lea.vmem %s5, %s1751
        $region64: #{_lambda_.1} parent=55 // pred_fallthru
          _
      $region56: #{_lambda_.1} parent=5 // pred_fallthru
        _
    $region6: #{_lambda_.1} parent=1 // loop_footer
      %s20 = sadd.s32 1, %s16
    $region7: #{_lambda_.1} parent=1 // loop_footer_branch
      %15 = sbr.rel target = $region3
    $region8: #{_lambda_.1} parent=1 // loop_exit
      _
    %1753 = vsyncpa [#allocation4], 1
    %s1754 = scalar_lea.sflag [#allocation4], 1
    %1755 = vsyncpa %s1754, 1
    %1756 = vsyncpa [#allocation5], 1
    %s1757 = scalar_lea.sflag [#allocation5], 1
    %1758 = vsyncpa %s1757, 1

</llo_original>
